<compile_context>
chip_gen: v7x
topology: tpu7x:2x2x1
jax: 0.10.0
libtpu: 0.0.40
codegen_flags: <defaults>
</compile_context>

<pallas_src>
import jax
import jax.numpy as jnp
from jax import lax
from jax.experimental import pallas as pl
from jax.experimental.pallas import tpu as pltpu


def _neg_identity(dtype):
    """Identity element for max in `dtype` (matches PyTorch's -inf padding)."""
    if jnp.issubdtype(dtype, jnp.floating):
        return jnp.array(-jnp.inf, dtype)
    return jnp.array(jnp.iinfo(dtype).min, dtype)


def _pool5(x, neg):
    """Stride-1 max pool, kernel 5, padding 2 (pad value = `neg`).

    x: (H, W, C) value with channels on lanes.  Separable: running max along H
    (major axis -> shifted slices are free vreg-row selects), then along W
    (sublane axis -> cheap sublane slices; never a lane shuffle).
    """
    H, W, C = x.shape
    # --- H axis ---
    pad_h = jnp.full((2, W, C), neg, x.dtype)
    xh = jnp.concatenate([pad_h, x, pad_h], axis=0)        # (H+4, W, C)
    out = xh[0:H]
    for d in range(1, 5):
        out = jnp.maximum(out, xh[d:d + H])
    # --- W axis ---
    pad_w = jnp.full((H, 2, C), neg, x.dtype)
    xw = jnp.concatenate([pad_w, out, pad_w], axis=1)      # (H, W+4, C)
    out = xw[:, 0:W]
    for d in range(1, 5):
        out = jnp.maximum(out, xw[:, d:d + W])
    return out


def spp_kernel(x_ref, o_ref):
    # x_ref: (1, H, W, C_BLK) channels-last block.
    # o_ref: (1, 4, H, W, C_BLK) block: [identity, pool5, pool9, pool13].
    x = x_ref[0]
    neg = _neg_identity(x.dtype)
    p5 = _pool5(x, neg)          # == MaxPool2d(5, 1, 2)(x)
    p9 = _pool5(p5, neg)         # == MaxPool2d(9, 1, 4)(x)   (exact SPPF identity)
    p13 = _pool5(p9, neg)        # == MaxPool2d(13, 1, 6)(x)
    o_ref[0, 0] = x
    o_ref[0, 1] = p5
    o_ref[0, 2] = p9
    o_ref[0, 3] = p13


def _pick_c_block(C):
    """Channel tile: lane-dense multiple of 128 when possible, else full C."""
    for blk in (256, 128):
        if C % blk == 0:
            return blk
    return C


def spatial_pyramid_pooling(x):
    """x: (N, C, H, W) -> (N, 4*C, H, W), identical to the PyTorch module."""
    N, C, H, W = x.shape
    c_blk = _pick_c_block(C)
    n_cblk = C // c_blk

    # VMEM budget per grid step: (input + 4x output) tiles, double-buffered.
    itemsize = jnp.dtype(x.dtype).itemsize
    step_bytes = (1 + 4) * H * W * c_blk * itemsize * 2
    vmem_limit = int(min(48 * 1024 * 1024,
                         max(32 * 1024 * 1024, 3 * step_bytes)))

    # Channels-last so C sits on the 128-lane axis inside the kernel.
    xt = jnp.transpose(x, (0, 2, 3, 1))                    # (N, H, W, C)

    out5 = pl.pallas_call(
        spp_kernel,
        out_shape=jax.ShapeDtypeStruct((N, 4, H, W, C), x.dtype),
        grid=(N, n_cblk),
        in_specs=[pl.BlockSpec((1, H, W, c_blk), lambda n, c: (n, 0, 0, c))],
        out_specs=pl.BlockSpec((1, 4, H, W, c_blk),
                               lambda n, c: (n, 0, 0, 0, c)),
        compiler_params=pltpu.CompilerParams(
            dimension_semantics=("parallel", "parallel"),
            vmem_limit_bytes=vmem_limit),
    )(xt)

    # (N, 4, H, W, C) -> (N, 4, C, H, W) -> (N, 4*C, H, W): same channel order
    # as torch.cat([x, p5, p9, p13], dim=1).
    return jnp.transpose(out5, (0, 1, 4, 2, 3)).reshape(N, 4 * C, H, W)


def _reference_spp(x):
    """Pure-JAX reference matching torch.nn.MaxPool2d(k, 1, k//2) + concat."""
    feats = [x]
    for k in (5, 9, 13):
        p = k // 2
        pooled = lax.reduce_window(
            x, -jnp.inf, lax.max,
            window_dimensions=(1, 1, k, k),
            window_strides=(1, 1, 1, 1),
            padding=((0, 0), (0, 0), (p, p), (p, p)))
        feats.append(pooled)
    return jnp.concatenate(feats, axis=1)


if __name__ == "__main__":
    key = jax.random.PRNGKey(0)
    x = jax.random.normal(key, (2, 4, 16, 16), dtype=jnp.float32)

    out = jax.block_until_ready(spatial_pyramid_pooling(x))
    ref = jax.block_until_ready(_reference_spp(x))

    assert out.shape == (2, 16, 16, 16), out.shape
    assert jnp.allclose(out, ref, atol=1e-6, rtol=1e-6), "mismatch vs reference"

    print("KERNEL_OK")
</pallas_src>

<mosaic_0001>
module attributes {stable_mosaic.version = 11 : i64} {
  func.func @spp_kernel(%arg0: i32, %arg1: i32, %arg2: memref<1x16x16x4xf32, #tpu.memory_space<vmem>>, %arg3: memref<1x4x16x16x4xf32, #tpu.memory_space<vmem>>) attributes {dimension_semantics = [#tpu.dimension_semantics<parallel>, #tpu.dimension_semantics<parallel>], iteration_bounds = array<i64: 2, 1>, scalar_prefetch = 0 : i64, scratch_operands = 0 : i64, tpu.core_type = #tpu.core_type<tc>, window_params = [{transform_indices = @transform_0, window_bounds = array<i64: 1, 16, 16, 4>}, {transform_indices = @transform_1, window_bounds = array<i64: 1, 4, 16, 16, 4>}]} {
    %c0 = arith.constant 0 : index
    %c0_0 = arith.constant 0 : index
    %c0_1 = arith.constant 0 : index
    %c0_2 = arith.constant 0 : index
    %0 = vector.load %arg2[%c0, %c0_0, %c0_1, %c0_2] : memref<1x16x16x4xf32, #tpu.memory_space<vmem>>, vector<1x16x16x4xf32>
    %1 = vector.shape_cast %0 : vector<1x16x16x4xf32> to vector<16x16x4xf32>
    %cst = arith.constant 0xFF800000 : f32
    %2 = vector.broadcast %cst : f32 to vector<2x16x4xf32>
    %3 = tpu.concatenate %2, %1, %2 in 0 : vector<2x16x4xf32>, vector<16x16x4xf32>, vector<2x16x4xf32> -> vector<20x16x4xf32>
    %4 = vector.extract_strided_slice %3 {offsets = [0, 0, 0], sizes = [16, 16, 4], strides = [1, 1, 1]} : vector<20x16x4xf32> to vector<16x16x4xf32>
    %5 = vector.extract_strided_slice %3 {offsets = [1, 0, 0], sizes = [16, 16, 4], strides = [1, 1, 1]} : vector<20x16x4xf32> to vector<16x16x4xf32>
    %6 = arith.maximumf %4, %5 : vector<16x16x4xf32>
    %7 = vector.extract_strided_slice %3 {offsets = [2, 0, 0], sizes = [16, 16, 4], strides = [1, 1, 1]} : vector<20x16x4xf32> to vector<16x16x4xf32>
    %8 = arith.maximumf %6, %7 : vector<16x16x4xf32>
    %9 = vector.extract_strided_slice %3 {offsets = [3, 0, 0], sizes = [16, 16, 4], strides = [1, 1, 1]} : vector<20x16x4xf32> to vector<16x16x4xf32>
    %10 = arith.maximumf %8, %9 : vector<16x16x4xf32>
    %11 = vector.extract_strided_slice %3 {offsets = [4, 0, 0], sizes = [16, 16, 4], strides = [1, 1, 1]} : vector<20x16x4xf32> to vector<16x16x4xf32>
    %12 = arith.maximumf %10, %11 : vector<16x16x4xf32>
    %cst_3 = arith.constant 0xFF800000 : f32
    %13 = vector.broadcast %cst_3 : f32 to vector<16x2x4xf32>
    %14 = tpu.concatenate %13, %12, %13 in 1 : vector<16x2x4xf32>, vector<16x16x4xf32>, vector<16x2x4xf32> -> vector<16x20x4xf32>
    %15 = vector.extract_strided_slice %14 {offsets = [0, 0, 0], sizes = [16, 16, 4], strides = [1, 1, 1]} : vector<16x20x4xf32> to vector<16x16x4xf32>
    %16 = vector.extract_strided_slice %14 {offsets = [0, 1, 0], sizes = [16, 16, 4], strides = [1, 1, 1]} : vector<16x20x4xf32> to vector<16x16x4xf32>
    %17 = arith.maximumf %15, %16 : vector<16x16x4xf32>
    %18 = vector.extract_strided_slice %14 {offsets = [0, 2, 0], sizes = [16, 16, 4], strides = [1, 1, 1]} : vector<16x20x4xf32> to vector<16x16x4xf32>
    %19 = arith.maximumf %17, %18 : vector<16x16x4xf32>
    %20 = vector.extract_strided_slice %14 {offsets = [0, 3, 0], sizes = [16, 16, 4], strides = [1, 1, 1]} : vector<16x20x4xf32> to vector<16x16x4xf32>
    %21 = arith.maximumf %19, %20 : vector<16x16x4xf32>
    %22 = vector.extract_strided_slice %14 {offsets = [0, 4, 0], sizes = [16, 16, 4], strides = [1, 1, 1]} : vector<16x20x4xf32> to vector<16x16x4xf32>
    %23 = arith.maximumf %21, %22 : vector<16x16x4xf32>
    %cst_4 = arith.constant 0xFF800000 : f32
    %24 = vector.broadcast %cst_4 : f32 to vector<2x16x4xf32>
    %25 = tpu.concatenate %24, %23, %24 in 0 : vector<2x16x4xf32>, vector<16x16x4xf32>, vector<2x16x4xf32> -> vector<20x16x4xf32>
    %26 = vector.extract_strided_slice %25 {offsets = [0, 0, 0], sizes = [16, 16, 4], strides = [1, 1, 1]} : vector<20x16x4xf32> to vector<16x16x4xf32>
    %27 = vector.extract_strided_slice %25 {offsets = [1, 0, 0], sizes = [16, 16, 4], strides = [1, 1, 1]} : vector<20x16x4xf32> to vector<16x16x4xf32>
    %28 = arith.maximumf %26, %27 : vector<16x16x4xf32>
    %29 = vector.extract_strided_slice %25 {offsets = [2, 0, 0], sizes = [16, 16, 4], strides = [1, 1, 1]} : vector<20x16x4xf32> to vector<16x16x4xf32>
    %30 = arith.maximumf %28, %29 : vector<16x16x4xf32>
    %31 = vector.extract_strided_slice %25 {offsets = [3, 0, 0], sizes = [16, 16, 4], strides = [1, 1, 1]} : vector<20x16x4xf32> to vector<16x16x4xf32>
    %32 = arith.maximumf %30, %31 : vector<16x16x4xf32>
    %33 = vector.extract_strided_slice %25 {offsets = [4, 0, 0], sizes = [16, 16, 4], strides = [1, 1, 1]} : vector<20x16x4xf32> to vector<16x16x4xf32>
    %34 = arith.maximumf %32, %33 : vector<16x16x4xf32>
    %cst_5 = arith.constant 0xFF800000 : f32
    %35 = vector.broadcast %cst_5 : f32 to vector<16x2x4xf32>
    %36 = tpu.concatenate %35, %34, %35 in 1 : vector<16x2x4xf32>, vector<16x16x4xf32>, vector<16x2x4xf32> -> vector<16x20x4xf32>
    %37 = vector.extract_strided_slice %36 {offsets = [0, 0, 0], sizes = [16, 16, 4], strides = [1, 1, 1]} : vector<16x20x4xf32> to vector<16x16x4xf32>
    %38 = vector.extract_strided_slice %36 {offsets = [0, 1, 0], sizes = [16, 16, 4], strides = [1, 1, 1]} : vector<16x20x4xf32> to vector<16x16x4xf32>
    %39 = arith.maximumf %37, %38 : vector<16x16x4xf32>
    %40 = vector.extract_strided_slice %36 {offsets = [0, 2, 0], sizes = [16, 16, 4], strides = [1, 1, 1]} : vector<16x20x4xf32> to vector<16x16x4xf32>
    %41 = arith.maximumf %39, %40 : vector<16x16x4xf32>
    %42 = vector.extract_strided_slice %36 {offsets = [0, 3, 0], sizes = [16, 16, 4], strides = [1, 1, 1]} : vector<16x20x4xf32> to vector<16x16x4xf32>
    %43 = arith.maximumf %41, %42 : vector<16x16x4xf32>
    %44 = vector.extract_strided_slice %36 {offsets = [0, 4, 0], sizes = [16, 16, 4], strides = [1, 1, 1]} : vector<16x20x4xf32> to vector<16x16x4xf32>
    %45 = arith.maximumf %43, %44 : vector<16x16x4xf32>
    %cst_6 = arith.constant 0xFF800000 : f32
    %46 = vector.broadcast %cst_6 : f32 to vector<2x16x4xf32>
    %47 = tpu.concatenate %46, %45, %46 in 0 : vector<2x16x4xf32>, vector<16x16x4xf32>, vector<2x16x4xf32> -> vector<20x16x4xf32>
    %48 = vector.extract_strided_slice %47 {offsets = [0, 0, 0], sizes = [16, 16, 4], strides = [1, 1, 1]} : vector<20x16x4xf32> to vector<16x16x4xf32>
    %49 = vector.extract_strided_slice %47 {offsets = [1, 0, 0], sizes = [16, 16, 4], strides = [1, 1, 1]} : vector<20x16x4xf32> to vector<16x16x4xf32>
    %50 = arith.maximumf %48, %49 : vector<16x16x4xf32>
    %51 = vector.extract_strided_slice %47 {offsets = [2, 0, 0], sizes = [16, 16, 4], strides = [1, 1, 1]} : vector<20x16x4xf32> to vector<16x16x4xf32>
    %52 = arith.maximumf %50, %51 : vector<16x16x4xf32>
    %53 = vector.extract_strided_slice %47 {offsets = [3, 0, 0], sizes = [16, 16, 4], strides = [1, 1, 1]} : vector<20x16x4xf32> to vector<16x16x4xf32>
    %54 = arith.maximumf %52, %53 : vector<16x16x4xf32>
    %55 = vector.extract_strided_slice %47 {offsets = [4, 0, 0], sizes = [16, 16, 4], strides = [1, 1, 1]} : vector<20x16x4xf32> to vector<16x16x4xf32>
    %56 = arith.maximumf %54, %55 : vector<16x16x4xf32>
    %cst_7 = arith.constant 0xFF800000 : f32
    %57 = vector.broadcast %cst_7 : f32 to vector<16x2x4xf32>
    %58 = tpu.concatenate %57, %56, %57 in 1 : vector<16x2x4xf32>, vector<16x16x4xf32>, vector<16x2x4xf32> -> vector<16x20x4xf32>
    %59 = vector.extract_strided_slice %58 {offsets = [0, 0, 0], sizes = [16, 16, 4], strides = [1, 1, 1]} : vector<16x20x4xf32> to vector<16x16x4xf32>
    %60 = vector.extract_strided_slice %58 {offsets = [0, 1, 0], sizes = [16, 16, 4], strides = [1, 1, 1]} : vector<16x20x4xf32> to vector<16x16x4xf32>
    %61 = arith.maximumf %59, %60 : vector<16x16x4xf32>
    %62 = vector.extract_strided_slice %58 {offsets = [0, 2, 0], sizes = [16, 16, 4], strides = [1, 1, 1]} : vector<16x20x4xf32> to vector<16x16x4xf32>
    %63 = arith.maximumf %61, %62 : vector<16x16x4xf32>
    %64 = vector.extract_strided_slice %58 {offsets = [0, 3, 0], sizes = [16, 16, 4], strides = [1, 1, 1]} : vector<16x20x4xf32> to vector<16x16x4xf32>
    %65 = arith.maximumf %63, %64 : vector<16x16x4xf32>
    %66 = vector.extract_strided_slice %58 {offsets = [0, 4, 0], sizes = [16, 16, 4], strides = [1, 1, 1]} : vector<16x20x4xf32> to vector<16x16x4xf32>
    %67 = arith.maximumf %65, %66 : vector<16x16x4xf32>
    %c0_8 = arith.constant 0 : index
    %c0_9 = arith.constant 0 : index
    %c0_10 = arith.constant 0 : index
    %c0_11 = arith.constant 0 : index
    %c0_12 = arith.constant 0 : index
    %68 = vector.load %arg3[%c0_8, %c0_9, %c0_10, %c0_11, %c0_12] : memref<1x4x16x16x4xf32, #tpu.memory_space<vmem>>, vector<1x1x16x16x4xf32>
    %69 = vector.shape_cast %68 : vector<1x1x16x16x4xf32> to vector<16x16x4xf32>
    %70 = vector.shape_cast %1 : vector<16x16x4xf32> to vector<1x1x16x16x4xf32>
    tpu.vector_store %arg3[%c0_8, %c0_9, %c0_10, %c0_11, %c0_12], %70 {strides = array<i32>} : memref<1x4x16x16x4xf32, #tpu.memory_space<vmem>>, vector<1x1x16x16x4xf32>,
    %c0_13 = arith.constant 0 : index
    %c1 = arith.constant 1 : index
    %c0_14 = arith.constant 0 : index
    %c0_15 = arith.constant 0 : index
    %c0_16 = arith.constant 0 : index
    %71 = vector.load %arg3[%c0_13, %c1, %c0_14, %c0_15, %c0_16] : memref<1x4x16x16x4xf32, #tpu.memory_space<vmem>>, vector<1x1x16x16x4xf32>
    %72 = vector.shape_cast %71 : vector<1x1x16x16x4xf32> to vector<16x16x4xf32>
    %73 = vector.shape_cast %23 : vector<16x16x4xf32> to vector<1x1x16x16x4xf32>
    tpu.vector_store %arg3[%c0_13, %c1, %c0_14, %c0_15, %c0_16], %73 {strides = array<i32>} : memref<1x4x16x16x4xf32, #tpu.memory_space<vmem>>, vector<1x1x16x16x4xf32>,
    %c0_17 = arith.constant 0 : index
    %c2 = arith.constant 2 : index
    %c0_18 = arith.constant 0 : index
    %c0_19 = arith.constant 0 : index
    %c0_20 = arith.constant 0 : index
    %74 = vector.load %arg3[%c0_17, %c2, %c0_18, %c0_19, %c0_20] : memref<1x4x16x16x4xf32, #tpu.memory_space<vmem>>, vector<1x1x16x16x4xf32>
    %75 = vector.shape_cast %74 : vector<1x1x16x16x4xf32> to vector<16x16x4xf32>
    %76 = vector.shape_cast %45 : vector<16x16x4xf32> to vector<1x1x16x16x4xf32>
    tpu.vector_store %arg3[%c0_17, %c2, %c0_18, %c0_19, %c0_20], %76 {strides = array<i32>} : memref<1x4x16x16x4xf32, #tpu.memory_space<vmem>>, vector<1x1x16x16x4xf32>,
    %c0_21 = arith.constant 0 : index
    %c3 = arith.constant 3 : index
    %c0_22 = arith.constant 0 : index
    %c0_23 = arith.constant 0 : index
    %c0_24 = arith.constant 0 : index
    %77 = vector.load %arg3[%c0_21, %c3, %c0_22, %c0_23, %c0_24] : memref<1x4x16x16x4xf32, #tpu.memory_space<vmem>>, vector<1x1x16x16x4xf32>
    %78 = vector.shape_cast %77 : vector<1x1x16x16x4xf32> to vector<16x16x4xf32>
    %79 = vector.shape_cast %67 : vector<16x16x4xf32> to vector<1x1x16x16x4xf32>
    tpu.vector_store %arg3[%c0_21, %c3, %c0_22, %c0_23, %c0_24], %79 {strides = array<i32>} : memref<1x4x16x16x4xf32, #tpu.memory_space<vmem>>, vector<1x1x16x16x4xf32>,
    return
  }
  func.func @transform_0(%arg0: i32, %arg1: i32) -> (i32, i32, i32, i32) {
    %c0_i32 = arith.constant 0 : i32
    %c0_i32_0 = arith.constant 0 : i32
    %c0_i32_1 = arith.constant 0 : i32
    return %arg0, %c0_i32, %c0_i32_0, %arg1 : i32, i32, i32, i32
  }
  func.func @transform_1(%arg0: i32, %arg1: i32) -> (i32, i32, i32, i32, i32) {
    %c0_i32 = arith.constant 0 : i32
    %c0_i32_0 = arith.constant 0 : i32
    %c0_i32_1 = arith.constant 0 : i32
    %c0_i32_2 = arith.constant 0 : i32
    return %arg0, %c0_i32, %c0_i32_0, %c0_i32_1, %arg1 : i32, i32, i32, i32, i32
  }
}

</mosaic_0001>

<llo_original>
// kernel: tpu_custom_call.1
$region0: #{tpu_custom_call.1}
  #allocation0 [shape = 'u32[]', space=smem, size = 0x4, offset = 0x4, fixed_abs, tag = 'smem constant byte address 0x4 - core index']
  #allocation1 [shape = 'u32[144,128]{1,0:T(1,128)}', space=vmem, size = 0x12000, scoped, tag = 'internal scratch']
  %s0 = inlined_call_operand.vmem [shape: f32[2,16,16,4], index: 0, kind: input, shape index: {}]
  %s1 = inlined_call_operand.vmem [shape: f32[2,4,16,16,4], index: 1, kind: output, shape index: {}]
  %s2 = sld [smem:[#allocation0]]
  $region37: #{tpu_custom_call.1} parent=0
    _
  %s4 = ssub.s32 1, %s2
  %s5 = scalar_select 0, %s4, %s2
  loop: start=0, step=1, limit=4
  $region2: #{tpu_custom_call.1} parent=0 // loop_pre_header
    _
  $region3: #{tpu_custom_call.1} parent=0 // loop_header
    %s7 = sphi 0, %s11
    %p8 = scmp.ge.s32.totalorder %s7, 4
    %s14 = sphi 0, %s26
    %s15 = sphi 0, %s22
    %s16 = sphi 0, %s14
    %s17 = sphi 0, %s15
    %s18 = sphi 0, %s16
    %s19 = sphi 0, %s17
    %s31 = sphi 0, %s33
    %s34 = sphi 0, %s31
    %s35 = sphi 0, %s34
    %s51 = sphi 0, %s35
    %s59 = sphi 0, %s61
    %s62 = sphi 0, %s59
    %s63 = sphi 0, %s62
    %s79 = sphi 0, %s63
  $region4: #{tpu_custom_call.1} parent=0 // loop_header_branch
    %10 = sbr.rel (%p8) target = $region8
  $region5: #{tpu_custom_call.1} parent=0 // loop_body
    %s12 = ssub.s32 %s7, 1
    %s13 = ssub.s32 %s7, 2
    %s20 = sadd.s32 1, %s15
    %p21 = scmp.ge.s32.totalorder %s20, 1
    %s22 = scalar_select %p21, 0, %s20
    %s23 = sadd.s32 1, %s14
    %s24 = scalar_select %p21, %s23, %s14
    %p25 = scmp.ge.s32.totalorder %s24, 2
    %s26 = scalar_select %p25, 0, %s24
    %s27 = ssub.s32 %s14, %s26
    %s28 = ssub.s32 %s15, %s22
    %s29 = sor.u32 %s27, %s28
    %p30 = scmp.eq.s32.totalorder %s29, 0
    %s32 = sadd.s32 %s31, 1
    %s33 = scalar_select %p30, %s31, %s32
    %p36 = pneg %p30
    %p37 = scmp.eq.s32.totalorder %s7, 1
    %p38 = por %p36, %p37
    %p39 = scmp.ne.s32.totalorder %s31, %s34
    %p40 = scmp.eq.s32.totalorder %s7, 0
    %p41 = por %p39, %p40
    %p42 = scmp.ne.s32.totalorder %s31, %s34
    %p43 = scmp.eq.s32.totalorder %s12, 1
    %p44 = por %p42, %p43
    %p45 = scmp.ne.s32.totalorder %s34, %s35
    %p46 = scmp.eq.s32.totalorder %s12, 0
    %p47 = por %p45, %p46
    %p48 = scmp.ne.s32.totalorder %s34, %s35
    %p49 = scmp.eq.s32.totalorder %s13, 1
    %p50 = por %p48, %p49
    %p52 = scmp.ne.s32.totalorder %s35, %s51
    %p53 = scmp.eq.s32.totalorder %s13, 0
    %p54 = por %p52, %p53
    %s55 = ssub.s32 %s14, %s26
    %s56 = ssub.s32 %s15, %s22
    %s57 = sor.u32 %s55, %s56
    %p58 = scmp.eq.s32.totalorder %s57, 0
    %s60 = sadd.s32 %s59, 1
    %s61 = scalar_select %p58, %s59, %s60
    %p64 = pneg %p58
    %p65 = scmp.eq.s32.totalorder %s7, 1
    %p66 = por %p64, %p65
    %p67 = scmp.ne.s32.totalorder %s59, %s62
    %p68 = scmp.eq.s32.totalorder %s7, 0
    %p69 = por %p67, %p68
    %p70 = scmp.ne.s32.totalorder %s59, %s62
    %p71 = scmp.eq.s32.totalorder %s12, 1
    %p72 = por %p70, %p71
    %p73 = scmp.ne.s32.totalorder %s62, %s63
    %p74 = scmp.eq.s32.totalorder %s12, 0
    %p75 = por %p73, %p74
    %p76 = scmp.ne.s32.totalorder %s62, %s63
    %p77 = scmp.eq.s32.totalorder %s13, 1
    %p78 = por %p76, %p77
    %p80 = scmp.ne.s32.totalorder %s63, %s79
    %p81 = scmp.eq.s32.totalorder %s13, 0
    %p82 = por %p80, %p81
    %p83 = scmp.le.s32.totalorder 1, %s7
    %p84 = scmp.lt.s32.totalorder %s7, 3
    %p85 = pnand %p83, %p84
    %p86 = pneg %p85
    // Predicated region
    $region9: #{tpu_custom_call.1} parent=5 // pred_check
      _
    $region10: #{tpu_custom_call.1} parent=5 // pred_check_branch
      %88 = sbr.rel (%p85) target = $region12
    $region11: #{tpu_custom_call.1} parent=5 // pred_region
      %s89 = ssub.s32 %s7, 1
    $region12: #{tpu_custom_call.1} parent=5 // pred_fallthru
      _
    %p90 = scmp.lt.s32.totalorder %s7, 2
    // Predicated region
    $region13: #{tpu_custom_call.1} parent=5 // pred_check
      %p91 = pneg %p90
    $region14: #{tpu_custom_call.1} parent=5 // pred_check_branch
      %93 = sbr.rel (%p91) target = $region16
    $region15: #{tpu_custom_call.1} parent=5 // pred_region
      // Predicated region
      $region17: #{tpu_custom_call.1} parent=15 // pred_check
        %p94 = pneg %p41
      $region18: #{tpu_custom_call.1} parent=15 // pred_check_branch
        %96 = sbr.rel (%p94) target = $region20
      $region19: #{tpu_custom_call.1} parent=15 // pred_region
        %p97 = scmp.lt.s32.totalorder %s14, 1
        %s98 = scalar_select %p97, %s14, 1
        %p99 = scmp.lt.s32.totalorder %s15, 0
        %s100 = scalar_select %p99, %s15, 0
        %s101 = smul.addr %s98, 32
        %s102 = sadd.s32 %s100, %s101
        %s103 = smul.addr %s102, 8
        %s104 = scalar_lea.vmem %s0, %s103
      $region20: #{tpu_custom_call.1} parent=15 // pred_fallthru
        _
    $region16: #{tpu_custom_call.1} parent=5 // pred_fallthru
      _
    %p105 = scmp.le.s32.totalorder 1, %s7
    %p106 = scmp.lt.s32.totalorder %s7, 3
    %p107 = pnand %p105, %p106
    %p108 = pneg %p107
    // Predicated region
    $region21: #{tpu_custom_call.1} parent=5 // pred_check
      _
    $region22: #{tpu_custom_call.1} parent=5 // pred_check_branch
      %110 = sbr.rel (%p107) target = $region24
    $region23: #{tpu_custom_call.1} parent=5 // pred_region
      %s111 = ssub.s32 %s7, 1
      %p112 = scmp.lt.s32.totalorder %s16, 1
      %s113 = scalar_select %p112, %s16, 1
      %p114 = scmp.lt.s32.totalorder %s17, 0
      %s115 = scalar_select %p114, %s17, 0
      %s116 = smul.addr %s113, 32
      %s117 = sadd.s32 %s115, %s116
      %s118 = smul.addr %s117, 8
      %s119 = scalar_lea.vmem %s0, %s118
      %p120 = pneg %p47
      %p121 = pneg %p44
      %p122 = pneg %p75
      %p123 = pneg %p72
      %p124 = scmp.lt.s32.totalorder %s16, 1
      %s125 = scalar_select %p124, %s16, 1
      %p126 = scmp.lt.s32.totalorder %s17, 0
      %s127 = scalar_select %p126, %s17, 0
      %s128 = smul.addr %s125, 128
      %s129 = sadd.s32 %s127, %s128
      %s130 = smul.addr %s129, 8
      %s131 = scalar_lea.vmem %s1, %s130
      %p132 = scmp.lt.s32.totalorder %s16, 1
      %s133 = scalar_select %p132, %s16, 1
      %p134 = scmp.lt.s32.totalorder %s17, 0
      %s135 = scalar_select %p134, %s17, 0
      %s136 = smul.addr %s133, 32
      %s137 = sadd.s32 %s135, %s136
      %s138 = smul.addr %s137, 8
      %s139 = scalar_lea.vmem %s0, %s138
      %p140 = scmp.lt.s32.totalorder %s16, 1
      %s141 = scalar_select %p140, %s16, 1
      %p142 = scmp.lt.s32.totalorder %s17, 0
      %s143 = scalar_select %p142, %s17, 0
      %s144 = smul.addr %s141, 128
      %s145 = sadd.s32 %s143, %s144
      %s146 = smul.addr %s145, 8
      %s147 = scalar_lea.vmem %s1, %s146
      %v148 = vld [vmem:[%s139] sm:$0xff]
      %v149 = vld [vmem:[%s139 + $0x8] sm:$0xff]
      %v150 = vld [vmem:[%s139 + $0x10] sm:$0xff]
      %v151 = vld [vmem:[%s139 + $0x18] sm:$0xff]
      %v152 = vld [vmem:[%s139 + $0x20] sm:$0xff]
      %v153 = vld [vmem:[%s139 + $0x28] sm:$0xff]
      %v154 = vld [vmem:[%s139 + $0x30] sm:$0xff]
      %v155 = vld [vmem:[%s139 + $0x38] sm:$0xff]
      %v156 = vld [vmem:[%s139 + $0x40] sm:$0xff]
      %v157 = vld [vmem:[%s139 + $0x48] sm:$0xff]
      %v158 = vld [vmem:[%s139 + $0x50] sm:$0xff]
      %v159 = vld [vmem:[%s139 + $0x58] sm:$0xff]
      %v160 = vld [vmem:[%s139 + $0x60] sm:$0xff]
      %v161 = vld [vmem:[%s139 + $0x68] sm:$0xff]
      %v162 = vld [vmem:[%s139 + $0x70] sm:$0xff]
      %v163 = vld [vmem:[%s139 + $0x78] sm:$0xff]
      %v164 = vld [vmem:[%s139 + $0x80] sm:$0xff]
      %v165 = vld [vmem:[%s139 + $0x88] sm:$0xff]
      %v166 = vld [vmem:[%s139 + $0x90] sm:$0xff]
      %v167 = vld [vmem:[%s139 + $0x98] sm:$0xff]
      %v168 = vld [vmem:[%s139 + $0xa0] sm:$0xff]
      %v169 = vld [vmem:[%s139 + $0xa8] sm:$0xff]
      %v170 = vld [vmem:[%s139 + $0xb0] sm:$0xff]
      %v171 = vld [vmem:[%s139 + $0xb8] sm:$0xff]
      %v172 = vld [vmem:[%s139 + $0xc0] sm:$0xff]
      %v173 = vld [vmem:[%s139 + $0xc8] sm:$0xff]
      %v174 = vld [vmem:[%s139 + $0xd0] sm:$0xff]
      %v175 = vld [vmem:[%s139 + $0xd8] sm:$0xff]
      %v176 = vld [vmem:[%s139 + $0xe0] sm:$0xff]
      %v177 = vld [vmem:[%s139 + $0xe8] sm:$0xff]
      %v178 = vld [vmem:[%s139 + $0xf0] sm:$0xff]
      %v179 = vld [vmem:[%s139 + $0xf8] sm:$0xff]
      %v180 = vmax.f32 %v148, %v150
      %v181 = vmax.f32 %v149, %v151
      %v182 = vmax.f32 %v150, %v152
      %v183 = vmax.f32 %v151, %v153
      %v184 = vmax.f32 %v152, %v154
      %v185 = vmax.f32 %v153, %v155
      %v186 = vmax.f32 %v154, %v156
      %v187 = vmax.f32 %v155, %v157
      %v188 = vmax.f32 %v156, %v158
      %v189 = vmax.f32 %v157, %v159
      %v190 = vmax.f32 %v158, %v160
      %v191 = vmax.f32 %v159, %v161
      %v192 = vmax.f32 %v160, %v162
      %v193 = vmax.f32 %v161, %v163
      %v194 = vmax.f32 %v162, %v164
      %v195 = vmax.f32 %v163, %v165
      %v196 = vmax.f32 %v164, %v166
      %v197 = vmax.f32 %v165, %v167
      %v198 = vmax.f32 %v166, %v168
      %v199 = vmax.f32 %v167, %v169
      %v200 = vmax.f32 %v168, %v170
      %v201 = vmax.f32 %v169, %v171
      %v202 = vmax.f32 %v170, %v172
      %v203 = vmax.f32 %v171, %v173
      %v204 = vmax.f32 %v172, %v174
      %v205 = vmax.f32 %v173, %v175
      %v206 = vmax.f32 %v174, %v176
      %v207 = vmax.f32 %v175, %v177
      %v208 = vmax.f32 %v180, %v152
      %v209 = vmax.f32 %v181, %v153
      %v210 = vmax.f32 %v182, %v154
      %v211 = vmax.f32 %v183, %v155
      %v212 = vmax.f32 %v184, %v156
      %v213 = vmax.f32 %v185, %v157
      %v214 = vmax.f32 %v186, %v158
      %v215 = vmax.f32 %v187, %v159
      %v216 = vmax.f32 %v188, %v160
      %v217 = vmax.f32 %v189, %v161
      %v218 = vmax.f32 %v190, %v162
      %v219 = vmax.f32 %v191, %v163
      %v220 = vmax.f32 %v192, %v164
      %v221 = vmax.f32 %v193, %v165
      %v222 = vmax.f32 %v194, %v166
      %v223 = vmax.f32 %v195, %v167
      %v224 = vmax.f32 %v196, %v168
      %v225 = vmax.f32 %v197, %v169
      %v226 = vmax.f32 %v198, %v170
      %v227 = vmax.f32 %v199, %v171
      %v228 = vmax.f32 %v200, %v172
      %v229 = vmax.f32 %v201, %v173
      %v230 = vmax.f32 %v202, %v174
      %v231 = vmax.f32 %v203, %v175
      %v232 = vmax.f32 %v204, %v176
      %v233 = vmax.f32 %v205, %v177
      %v234 = vmax.f32 %v206, %v178
      %v235 = vmax.f32 %v207, %v179
      %v236 = vmax.f32 %v208, %v154
      %v237 = vmax.f32 %v209, %v155
      %v238 = vmax.f32 %v210, %v156
      %v239 = vmax.f32 %v211, %v157
      %v240 = vmax.f32 %v212, %v158
      %v241 = vmax.f32 %v213, %v159
      %v242 = vmax.f32 %v214, %v160
      %v243 = vmax.f32 %v215, %v161
      %v244 = vmax.f32 %v216, %v162
      %v245 = vmax.f32 %v217, %v163
      %v246 = vmax.f32 %v218, %v164
      %v247 = vmax.f32 %v219, %v165
      %v248 = vmax.f32 %v220, %v166
      %v249 = vmax.f32 %v221, %v167
      %v250 = vmax.f32 %v222, %v168
      %v251 = vmax.f32 %v223, %v169
      %v252 = vmax.f32 %v224, %v170
      %v253 = vmax.f32 %v225, %v171
      %v254 = vmax.f32 %v226, %v172
      %v255 = vmax.f32 %v227, %v173
      %v256 = vmax.f32 %v228, %v174
      %v257 = vmax.f32 %v229, %v175
      %v258 = vmax.f32 %v230, %v176
      %v259 = vmax.f32 %v231, %v177
      %v260 = vmax.f32 %v232, %v178
      %v261 = vmax.f32 %v233, %v179
      %v262 = vmax.f32 %v236, %v156
      %v263 = vmax.f32 %v237, %v157
      %v264 = vmax.f32 %v238, %v158
      %v265 = vmax.f32 %v239, %v159
      %v266 = vmax.f32 %v240, %v160
      %v267 = vmax.f32 %v241, %v161
      %v268 = vmax.f32 %v242, %v162
      %v269 = vmax.f32 %v243, %v163
      %v270 = vmax.f32 %v244, %v164
      %v271 = vmax.f32 %v245, %v165
      %v272 = vmax.f32 %v246, %v166
      %v273 = vmax.f32 %v247, %v167
      %v274 = vmax.f32 %v248, %v168
      %v275 = vmax.f32 %v249, %v169
      %v276 = vmax.f32 %v250, %v170
      %v277 = vmax.f32 %v251, %v171
      %v278 = vmax.f32 %v252, %v172
      %v279 = vmax.f32 %v253, %v173
      %v280 = vmax.f32 %v254, %v174
      %v281 = vmax.f32 %v255, %v175
      %v282 = vmax.f32 %v256, %v176
      %v283 = vmax.f32 %v257, %v177
      %v284 = vmax.f32 %v258, %v178
      %v285 = vmax.f32 %v259, %v179
      %vm318 = vcmask 1041408
      %v319 = vrot.slane %v208, 6
      %v320 = vrot.slane %v209, 6
      %v321 = vsel %vm318, %v319, %v320
      %v322 = vrot.slane %v236, 6
      %v323 = vrot.slane %v237, 6
      %v324 = vsel %vm318, %v322, %v323
      %v325 = vrot.slane %v262, 6
      %v326 = vrot.slane %v263, 6
      %v327 = vsel %vm318, %v325, %v326
      %v328 = vrot.slane %v264, 6
      %v329 = vrot.slane %v265, 6
      %v330 = vsel %vm318, %v328, %v329
      %v331 = vrot.slane %v266, 6
      %v332 = vrot.slane %v267, 6
      %v333 = vsel %vm318, %v331, %v332
      %v334 = vrot.slane %v268, 6
      %v335 = vrot.slane %v269, 6
      %v336 = vsel %vm318, %v334, %v335
      %v337 = vrot.slane %v270, 6
      %v338 = vrot.slane %v271, 6
      %v339 = vsel %vm318, %v337, %v338
      %v340 = vrot.slane %v272, 6
      %v341 = vrot.slane %v273, 6
      %v342 = vsel %vm318, %v340, %v341
      %v343 = vrot.slane %v274, 6
      %v344 = vrot.slane %v275, 6
      %v345 = vsel %vm318, %v343, %v344
      %v346 = vrot.slane %v276, 6
      %v347 = vrot.slane %v277, 6
      %v348 = vsel %vm318, %v346, %v347
      %v349 = vrot.slane %v278, 6
      %v350 = vrot.slane %v279, 6
      %v351 = vsel %vm318, %v349, %v350
      %v352 = vrot.slane %v280, 6
      %v353 = vrot.slane %v281, 6
      %v354 = vsel %vm318, %v352, %v353
      %v355 = vrot.slane %v282, 6
      %v356 = vrot.slane %v283, 6
      %v357 = vsel %vm318, %v355, %v356
      %v358 = vrot.slane %v284, 6
      %v359 = vrot.slane %v285, 6
      %v360 = vsel %vm318, %v358, %v359
      %v361 = vrot.slane %v260, 6
      %v362 = vrot.slane %v261, 6
      %v363 = vsel %vm318, %v361, %v362
      %v364 = vrot.slane %v234, 6
      %v365 = vrot.slane %v235, 6
      %v366 = vsel %vm318, %v364, %v365
      %v415 = vsel %vm318, -inf, %v319
      %v416 = vsel %vm318, -inf, %v322
      %v417 = vsel %vm318, -inf, %v325
      %v418 = vsel %vm318, -inf, %v328
      %v419 = vsel %vm318, -inf, %v331
      %v420 = vsel %vm318, -inf, %v334
      %v421 = vsel %vm318, -inf, %v337
      %v422 = vsel %vm318, -inf, %v340
      %v423 = vsel %vm318, -inf, %v343
      %v424 = vsel %vm318, -inf, %v346
      %v425 = vsel %vm318, -inf, %v349
      %v426 = vsel %vm318, -inf, %v352
      %v427 = vsel %vm318, -inf, %v355
      %v428 = vsel %vm318, -inf, %v358
      %v429 = vsel %vm318, -inf, %v361
      %v430 = vsel %vm318, -inf, %v364
      %v431 = vsel %vm318, %v320, -inf
      %v432 = vsel %vm318, %v323, -inf
      %v433 = vsel %vm318, %v326, -inf
      %v434 = vsel %vm318, %v329, -inf
      %v435 = vsel %vm318, %v332, -inf
      %v436 = vsel %vm318, %v335, -inf
      %v437 = vsel %vm318, %v338, -inf
      %v438 = vsel %vm318, %v341, -inf
      %v439 = vsel %vm318, %v344, -inf
      %v440 = vsel %vm318, %v347, -inf
      %v441 = vsel %vm318, %v350, -inf
      %v442 = vsel %vm318, %v353, -inf
      %v443 = vsel %vm318, %v356, -inf
      %v444 = vsel %vm318, %v359, -inf
      %v445 = vsel %vm318, %v362, -inf
      %v446 = vsel %vm318, %v365, -inf
      %vm479 = vcmask 1046528
      %v480 = vrot.slane %v415, 1
      %v481 = vrot.slane %v321, 1
      %v482 = vsel %vm479, %v480, %v481
      %v483 = vrot.slane %v431, 1
      %v484 = vsel %vm479, %v481, %v483
      %v485 = vrot.slane %v416, 1
      %v486 = vrot.slane %v324, 1
      %v487 = vsel %vm479, %v485, %v486
      %v488 = vrot.slane %v432, 1
      %v489 = vsel %vm479, %v486, %v488
      %v490 = vrot.slane %v417, 1
      %v491 = vrot.slane %v327, 1
      %v492 = vsel %vm479, %v490, %v491
      %v493 = vrot.slane %v433, 1
      %v494 = vsel %vm479, %v491, %v493
      %v495 = vrot.slane %v418, 1
      %v496 = vrot.slane %v330, 1
      %v497 = vsel %vm479, %v495, %v496
      %v498 = vrot.slane %v434, 1
      %v499 = vsel %vm479, %v496, %v498
      %v500 = vrot.slane %v419, 1
      %v501 = vrot.slane %v333, 1
      %v502 = vsel %vm479, %v500, %v501
      %v503 = vrot.slane %v435, 1
      %v504 = vsel %vm479, %v501, %v503
      %v505 = vrot.slane %v420, 1
      %v506 = vrot.slane %v336, 1
      %v507 = vsel %vm479, %v505, %v506
      %v508 = vrot.slane %v436, 1
      %v509 = vsel %vm479, %v506, %v508
      %v510 = vrot.slane %v421, 1
      %v511 = vrot.slane %v339, 1
      %v512 = vsel %vm479, %v510, %v511
      %v513 = vrot.slane %v437, 1
      %v514 = vsel %vm479, %v511, %v513
      %v515 = vrot.slane %v422, 1
      %v516 = vrot.slane %v342, 1
      %v517 = vsel %vm479, %v515, %v516
      %v518 = vrot.slane %v438, 1
      %v519 = vsel %vm479, %v516, %v518
      %v520 = vrot.slane %v423, 1
      %v521 = vrot.slane %v345, 1
      %v522 = vsel %vm479, %v520, %v521
      %v523 = vrot.slane %v439, 1
      %v524 = vsel %vm479, %v521, %v523
      %v525 = vrot.slane %v424, 1
      %v526 = vrot.slane %v348, 1
      %v527 = vsel %vm479, %v525, %v526
      %v528 = vrot.slane %v440, 1
      %v529 = vsel %vm479, %v526, %v528
      %v530 = vrot.slane %v425, 1
      %v531 = vrot.slane %v351, 1
      %v532 = vsel %vm479, %v530, %v531
      %v533 = vrot.slane %v441, 1
      %v534 = vsel %vm479, %v531, %v533
      %v535 = vrot.slane %v426, 1
      %v536 = vrot.slane %v354, 1
      %v537 = vsel %vm479, %v535, %v536
      %v538 = vrot.slane %v442, 1
      %v539 = vsel %vm479, %v536, %v538
      %v540 = vrot.slane %v427, 1
      %v541 = vrot.slane %v357, 1
      %v542 = vsel %vm479, %v540, %v541
      %v543 = vrot.slane %v443, 1
      %v544 = vsel %vm479, %v541, %v543
      %v545 = vrot.slane %v428, 1
      %v546 = vrot.slane %v360, 1
      %v547 = vsel %vm479, %v545, %v546
      %v548 = vrot.slane %v444, 1
      %v549 = vsel %vm479, %v546, %v548
      %v550 = vrot.slane %v429, 1
      %v551 = vrot.slane %v363, 1
      %v552 = vsel %vm479, %v550, %v551
      %v553 = vrot.slane %v445, 1
      %v554 = vsel %vm479, %v551, %v553
      %v555 = vrot.slane %v430, 1
      %v556 = vrot.slane %v366, 1
      %v557 = vsel %vm479, %v555, %v556
      %v558 = vrot.slane %v446, 1
      %v559 = vsel %vm479, %v556, %v558
      %v592 = vmax.f32 %v415, %v482
      %v593 = vmax.f32 %v321, %v484
      %v594 = vmax.f32 %v416, %v487
      %v595 = vmax.f32 %v324, %v489
      %v596 = vmax.f32 %v417, %v492
      %v597 = vmax.f32 %v327, %v494
      %v598 = vmax.f32 %v418, %v497
      %v599 = vmax.f32 %v330, %v499
      %v600 = vmax.f32 %v419, %v502
      %v601 = vmax.f32 %v333, %v504
      %v602 = vmax.f32 %v420, %v507
      %v603 = vmax.f32 %v336, %v509
      %v604 = vmax.f32 %v421, %v512
      %v605 = vmax.f32 %v339, %v514
      %v606 = vmax.f32 %v422, %v517
      %v607 = vmax.f32 %v342, %v519
      %v608 = vmax.f32 %v423, %v522
      %v609 = vmax.f32 %v345, %v524
      %v610 = vmax.f32 %v424, %v527
      %v611 = vmax.f32 %v348, %v529
      %v612 = vmax.f32 %v425, %v532
      %v613 = vmax.f32 %v351, %v534
      %v614 = vmax.f32 %v426, %v537
      %v615 = vmax.f32 %v354, %v539
      %v616 = vmax.f32 %v427, %v542
      %v617 = vmax.f32 %v357, %v544
      %v618 = vmax.f32 %v428, %v547
      %v619 = vmax.f32 %v360, %v549
      %v620 = vmax.f32 %v429, %v552
      %v621 = vmax.f32 %v363, %v554
      %v622 = vmax.f32 %v430, %v557
      %v623 = vmax.f32 %v366, %v559
      %vm624 = vcmask 1045504
      %v625 = vrot.slane %v415, 2
      %v626 = vrot.slane %v321, 2
      %v627 = vsel %vm624, %v625, %v626
      %v628 = vrot.slane %v431, 2
      %v629 = vsel %vm624, %v626, %v628
      %v630 = vrot.slane %v416, 2
      %v631 = vrot.slane %v324, 2
      %v632 = vsel %vm624, %v630, %v631
      %v633 = vrot.slane %v432, 2
      %v634 = vsel %vm624, %v631, %v633
      %v635 = vrot.slane %v417, 2
      %v636 = vrot.slane %v327, 2
      %v637 = vsel %vm624, %v635, %v636
      %v638 = vrot.slane %v433, 2
      %v639 = vsel %vm624, %v636, %v638
      %v640 = vrot.slane %v418, 2
      %v641 = vrot.slane %v330, 2
      %v642 = vsel %vm624, %v640, %v641
      %v643 = vrot.slane %v434, 2
      %v644 = vsel %vm624, %v641, %v643
      %v645 = vrot.slane %v419, 2
      %v646 = vrot.slane %v333, 2
      %v647 = vsel %vm624, %v645, %v646
      %v648 = vrot.slane %v435, 2
      %v649 = vsel %vm624, %v646, %v648
      %v650 = vrot.slane %v420, 2
      %v651 = vrot.slane %v336, 2
      %v652 = vsel %vm624, %v650, %v651
      %v653 = vrot.slane %v436, 2
      %v654 = vsel %vm624, %v651, %v653
      %v655 = vrot.slane %v421, 2
      %v656 = vrot.slane %v339, 2
      %v657 = vsel %vm624, %v655, %v656
      %v658 = vrot.slane %v437, 2
      %v659 = vsel %vm624, %v656, %v658
      %v660 = vrot.slane %v422, 2
      %v661 = vrot.slane %v342, 2
      %v662 = vsel %vm624, %v660, %v661
      %v663 = vrot.slane %v438, 2
      %v664 = vsel %vm624, %v661, %v663
      %v665 = vrot.slane %v423, 2
      %v666 = vrot.slane %v345, 2
      %v667 = vsel %vm624, %v665, %v666
      %v668 = vrot.slane %v439, 2
      %v669 = vsel %vm624, %v666, %v668
      %v670 = vrot.slane %v424, 2
      %v671 = vrot.slane %v348, 2
      %v672 = vsel %vm624, %v670, %v671
      %v673 = vrot.slane %v440, 2
      %v674 = vsel %vm624, %v671, %v673
      %v675 = vrot.slane %v425, 2
      %v676 = vrot.slane %v351, 2
      %v677 = vsel %vm624, %v675, %v676
      %v678 = vrot.slane %v441, 2
      %v679 = vsel %vm624, %v676, %v678
      %v680 = vrot.slane %v426, 2
      %v681 = vrot.slane %v354, 2
      %v682 = vsel %vm624, %v680, %v681
      %v683 = vrot.slane %v442, 2
      %v684 = vsel %vm624, %v681, %v683
      %v685 = vrot.slane %v427, 2
      %v686 = vrot.slane %v357, 2
      %v687 = vsel %vm624, %v685, %v686
      %v688 = vrot.slane %v443, 2
      %v689 = vsel %vm624, %v686, %v688
      %v690 = vrot.slane %v428, 2
      %v691 = vrot.slane %v360, 2
      %v692 = vsel %vm624, %v690, %v691
      %v693 = vrot.slane %v444, 2
      %v694 = vsel %vm624, %v691, %v693
      %v695 = vrot.slane %v429, 2
      %v696 = vrot.slane %v363, 2
      %v697 = vsel %vm624, %v695, %v696
      %v698 = vrot.slane %v445, 2
      %v699 = vsel %vm624, %v696, %v698
      %v700 = vrot.slane %v430, 2
      %v701 = vrot.slane %v366, 2
      %v702 = vsel %vm624, %v700, %v701
      %v703 = vrot.slane %v446, 2
      %v704 = vsel %vm624, %v701, %v703
      %v737 = vmax.f32 %v592, %v627
      %v738 = vmax.f32 %v593, %v629
      %v739 = vmax.f32 %v594, %v632
      %v740 = vmax.f32 %v595, %v634
      %v741 = vmax.f32 %v596, %v637
      %v742 = vmax.f32 %v597, %v639
      %v743 = vmax.f32 %v598, %v642
      %v744 = vmax.f32 %v599, %v644
      %v745 = vmax.f32 %v600, %v647
      %v746 = vmax.f32 %v601, %v649
      %v747 = vmax.f32 %v602, %v652
      %v748 = vmax.f32 %v603, %v654
      %v749 = vmax.f32 %v604, %v657
      %v750 = vmax.f32 %v605, %v659
      %v751 = vmax.f32 %v606, %v662
      %v752 = vmax.f32 %v607, %v664
      %v753 = vmax.f32 %v608, %v667
      %v754 = vmax.f32 %v609, %v669
      %v755 = vmax.f32 %v610, %v672
      %v756 = vmax.f32 %v611, %v674
      %v757 = vmax.f32 %v612, %v677
      %v758 = vmax.f32 %v613, %v679
      %v759 = vmax.f32 %v614, %v682
      %v760 = vmax.f32 %v615, %v684
      %v761 = vmax.f32 %v616, %v687
      %v762 = vmax.f32 %v617, %v689
      %v763 = vmax.f32 %v618, %v692
      %v764 = vmax.f32 %v619, %v694
      %v765 = vmax.f32 %v620, %v697
      %v766 = vmax.f32 %v621, %v699
      %v767 = vmax.f32 %v622, %v702
      %v768 = vmax.f32 %v623, %v704
      %vm769 = vcmask 1044480
      %v770 = vrot.slane %v415, 3
      %v771 = vrot.slane %v321, 3
      %v772 = vsel %vm769, %v770, %v771
      %v773 = vrot.slane %v431, 3
      %v774 = vsel %vm769, %v771, %v773
      %v775 = vrot.slane %v416, 3
      %v776 = vrot.slane %v324, 3
      %v777 = vsel %vm769, %v775, %v776
      %v778 = vrot.slane %v432, 3
      %v779 = vsel %vm769, %v776, %v778
      %v780 = vrot.slane %v417, 3
      %v781 = vrot.slane %v327, 3
      %v782 = vsel %vm769, %v780, %v781
      %v783 = vrot.slane %v433, 3
      %v784 = vsel %vm769, %v781, %v783
      %v785 = vrot.slane %v418, 3
      %v786 = vrot.slane %v330, 3
      %v787 = vsel %vm769, %v785, %v786
      %v788 = vrot.slane %v434, 3
      %v789 = vsel %vm769, %v786, %v788
      %v790 = vrot.slane %v419, 3
      %v791 = vrot.slane %v333, 3
      %v792 = vsel %vm769, %v790, %v791
      %v793 = vrot.slane %v435, 3
      %v794 = vsel %vm769, %v791, %v793
      %v795 = vrot.slane %v420, 3
      %v796 = vrot.slane %v336, 3
      %v797 = vsel %vm769, %v795, %v796
      %v798 = vrot.slane %v436, 3
      %v799 = vsel %vm769, %v796, %v798
      %v800 = vrot.slane %v421, 3
      %v801 = vrot.slane %v339, 3
      %v802 = vsel %vm769, %v800, %v801
      %v803 = vrot.slane %v437, 3
      %v804 = vsel %vm769, %v801, %v803
      %v805 = vrot.slane %v422, 3
      %v806 = vrot.slane %v342, 3
      %v807 = vsel %vm769, %v805, %v806
      %v808 = vrot.slane %v438, 3
      %v809 = vsel %vm769, %v806, %v808
      %v810 = vrot.slane %v423, 3
      %v811 = vrot.slane %v345, 3
      %v812 = vsel %vm769, %v810, %v811
      %v813 = vrot.slane %v439, 3
      %v814 = vsel %vm769, %v811, %v813
      %v815 = vrot.slane %v424, 3
      %v816 = vrot.slane %v348, 3
      %v817 = vsel %vm769, %v815, %v816
      %v818 = vrot.slane %v440, 3
      %v819 = vsel %vm769, %v816, %v818
      %v820 = vrot.slane %v425, 3
      %v821 = vrot.slane %v351, 3
      %v822 = vsel %vm769, %v820, %v821
      %v823 = vrot.slane %v441, 3
      %v824 = vsel %vm769, %v821, %v823
      %v825 = vrot.slane %v426, 3
      %v826 = vrot.slane %v354, 3
      %v827 = vsel %vm769, %v825, %v826
      %v828 = vrot.slane %v442, 3
      %v829 = vsel %vm769, %v826, %v828
      %v830 = vrot.slane %v427, 3
      %v831 = vrot.slane %v357, 3
      %v832 = vsel %vm769, %v830, %v831
      %v833 = vrot.slane %v443, 3
      %v834 = vsel %vm769, %v831, %v833
      %v835 = vrot.slane %v428, 3
      %v836 = vrot.slane %v360, 3
      %v837 = vsel %vm769, %v835, %v836
      %v838 = vrot.slane %v444, 3
      %v839 = vsel %vm769, %v836, %v838
      %v840 = vrot.slane %v429, 3
      %v841 = vrot.slane %v363, 3
      %v842 = vsel %vm769, %v840, %v841
      %v843 = vrot.slane %v445, 3
      %v844 = vsel %vm769, %v841, %v843
      %v845 = vrot.slane %v430, 3
      %v846 = vrot.slane %v366, 3
      %v847 = vsel %vm769, %v845, %v846
      %v848 = vrot.slane %v446, 3
      %v849 = vsel %vm769, %v846, %v848
      %v882 = vmax.f32 %v737, %v772
      %v883 = vmax.f32 %v738, %v774
      %v884 = vmax.f32 %v739, %v777
      %v885 = vmax.f32 %v740, %v779
      %v886 = vmax.f32 %v741, %v782
      %v887 = vmax.f32 %v742, %v784
      %v888 = vmax.f32 %v743, %v787
      %v889 = vmax.f32 %v744, %v789
      %v890 = vmax.f32 %v745, %v792
      %v891 = vmax.f32 %v746, %v794
      %v892 = vmax.f32 %v747, %v797
      %v893 = vmax.f32 %v748, %v799
      %v894 = vmax.f32 %v749, %v802
      %v895 = vmax.f32 %v750, %v804
      %v896 = vmax.f32 %v751, %v807
      %v897 = vmax.f32 %v752, %v809
      %v898 = vmax.f32 %v753, %v812
      %v899 = vmax.f32 %v754, %v814
      %v900 = vmax.f32 %v755, %v817
      %v901 = vmax.f32 %v756, %v819
      %v902 = vmax.f32 %v757, %v822
      %v903 = vmax.f32 %v758, %v824
      %v904 = vmax.f32 %v759, %v827
      %v905 = vmax.f32 %v760, %v829
      %v906 = vmax.f32 %v761, %v832
      %v907 = vmax.f32 %v762, %v834
      %v908 = vmax.f32 %v763, %v837
      %v909 = vmax.f32 %v764, %v839
      %v910 = vmax.f32 %v765, %v842
      %v911 = vmax.f32 %v766, %v844
      %v912 = vmax.f32 %v767, %v847
      %v913 = vmax.f32 %v768, %v849
      %vm914 = vcmask 1043456
      %v915 = vrot.slane %v415, 4
      %v916 = vrot.slane %v321, 4
      %v917 = vsel %vm914, %v915, %v916
      %v918 = vrot.slane %v431, 4
      %v919 = vsel %vm914, %v916, %v918
      %v920 = vrot.slane %v416, 4
      %v921 = vrot.slane %v324, 4
      %v922 = vsel %vm914, %v920, %v921
      %v923 = vrot.slane %v432, 4
      %v924 = vsel %vm914, %v921, %v923
      %v925 = vrot.slane %v417, 4
      %v926 = vrot.slane %v327, 4
      %v927 = vsel %vm914, %v925, %v926
      %v928 = vrot.slane %v433, 4
      %v929 = vsel %vm914, %v926, %v928
      %v930 = vrot.slane %v418, 4
      %v931 = vrot.slane %v330, 4
      %v932 = vsel %vm914, %v930, %v931
      %v933 = vrot.slane %v434, 4
      %v934 = vsel %vm914, %v931, %v933
      %v935 = vrot.slane %v419, 4
      %v936 = vrot.slane %v333, 4
      %v937 = vsel %vm914, %v935, %v936
      %v938 = vrot.slane %v435, 4
      %v939 = vsel %vm914, %v936, %v938
      %v940 = vrot.slane %v420, 4
      %v941 = vrot.slane %v336, 4
      %v942 = vsel %vm914, %v940, %v941
      %v943 = vrot.slane %v436, 4
      %v944 = vsel %vm914, %v941, %v943
      %v945 = vrot.slane %v421, 4
      %v946 = vrot.slane %v339, 4
      %v947 = vsel %vm914, %v945, %v946
      %v948 = vrot.slane %v437, 4
      %v949 = vsel %vm914, %v946, %v948
      %v950 = vrot.slane %v422, 4
      %v951 = vrot.slane %v342, 4
      %v952 = vsel %vm914, %v950, %v951
      %v953 = vrot.slane %v438, 4
      %v954 = vsel %vm914, %v951, %v953
      %v955 = vrot.slane %v423, 4
      %v956 = vrot.slane %v345, 4
      %v957 = vsel %vm914, %v955, %v956
      %v958 = vrot.slane %v439, 4
      %v959 = vsel %vm914, %v956, %v958
      %v960 = vrot.slane %v424, 4
      %v961 = vrot.slane %v348, 4
      %v962 = vsel %vm914, %v960, %v961
      %v963 = vrot.slane %v440, 4
      %v964 = vsel %vm914, %v961, %v963
      %v965 = vrot.slane %v425, 4
      %v966 = vrot.slane %v351, 4
      %v967 = vsel %vm914, %v965, %v966
      %v968 = vrot.slane %v441, 4
      %v969 = vsel %vm914, %v966, %v968
      %v970 = vrot.slane %v426, 4
      %v971 = vrot.slane %v354, 4
      %v972 = vsel %vm914, %v970, %v971
      %v973 = vrot.slane %v442, 4
      %v974 = vsel %vm914, %v971, %v973
      %v975 = vrot.slane %v427, 4
      %v976 = vrot.slane %v357, 4
      %v977 = vsel %vm914, %v975, %v976
      %v978 = vrot.slane %v443, 4
      %v979 = vsel %vm914, %v976, %v978
      %v980 = vrot.slane %v428, 4
      %v981 = vrot.slane %v360, 4
      %v982 = vsel %vm914, %v980, %v981
      %v983 = vrot.slane %v444, 4
      %v984 = vsel %vm914, %v981, %v983
      %v985 = vrot.slane %v429, 4
      %v986 = vrot.slane %v363, 4
      %v987 = vsel %vm914, %v985, %v986
      %v988 = vrot.slane %v445, 4
      %v989 = vsel %vm914, %v986, %v988
      %v990 = vrot.slane %v430, 4
      %v991 = vrot.slane %v366, 4
      %v992 = vsel %vm914, %v990, %v991
      %v993 = vrot.slane %v446, 4
      %v994 = vsel %vm914, %v991, %v993
      %v1027 = vmax.f32 %v882, %v917
      %v1028 = vmax.f32 %v883, %v919
      %v1029 = vmax.f32 %v884, %v922
      %v1030 = vmax.f32 %v885, %v924
      %v1031 = vmax.f32 %v886, %v927
      %v1032 = vmax.f32 %v887, %v929
      %v1033 = vmax.f32 %v888, %v932
      %v1034 = vmax.f32 %v889, %v934
      %v1035 = vmax.f32 %v890, %v937
      %v1036 = vmax.f32 %v891, %v939
      %v1037 = vmax.f32 %v892, %v942
      %v1038 = vmax.f32 %v893, %v944
      %v1039 = vmax.f32 %v894, %v947
      %v1040 = vmax.f32 %v895, %v949
      %v1041 = vmax.f32 %v896, %v952
      %v1042 = vmax.f32 %v897, %v954
      %v1043 = vmax.f32 %v898, %v957
      %v1044 = vmax.f32 %v899, %v959
      %v1045 = vmax.f32 %v900, %v962
      %v1046 = vmax.f32 %v901, %v964
      %v1047 = vmax.f32 %v902, %v967
      %v1048 = vmax.f32 %v903, %v969
      %v1049 = vmax.f32 %v904, %v972
      %v1050 = vmax.f32 %v905, %v974
      %v1051 = vmax.f32 %v906, %v977
      %v1052 = vmax.f32 %v907, %v979
      %v1053 = vmax.f32 %v908, %v982
      %v1054 = vmax.f32 %v909, %v984
      %v1055 = vmax.f32 %v910, %v987
      %v1056 = vmax.f32 %v911, %v989
      %v1057 = vmax.f32 %v912, %v992
      %v1058 = vmax.f32 %v913, %v994
      %v1059 = vmax.f32 %v1027, %v1029
      %v1060 = vmax.f32 %v1028, %v1030
      %v1061 = vmax.f32 %v1029, %v1031
      %v1062 = vmax.f32 %v1030, %v1032
      %v1063 = vmax.f32 %v1031, %v1033
      %v1064 = vmax.f32 %v1032, %v1034
      %v1065 = vmax.f32 %v1033, %v1035
      %v1066 = vmax.f32 %v1034, %v1036
      %v1067 = vmax.f32 %v1035, %v1037
      %v1068 = vmax.f32 %v1036, %v1038
      %v1069 = vmax.f32 %v1037, %v1039
      %v1070 = vmax.f32 %v1038, %v1040
      %v1071 = vmax.f32 %v1039, %v1041
      %v1072 = vmax.f32 %v1040, %v1042
      %v1073 = vmax.f32 %v1041, %v1043
      %v1074 = vmax.f32 %v1042, %v1044
      %v1075 = vmax.f32 %v1043, %v1045
      %v1076 = vmax.f32 %v1044, %v1046
      %v1077 = vmax.f32 %v1045, %v1047
      %v1078 = vmax.f32 %v1046, %v1048
      %v1079 = vmax.f32 %v1047, %v1049
      %v1080 = vmax.f32 %v1048, %v1050
      %v1081 = vmax.f32 %v1049, %v1051
      %v1082 = vmax.f32 %v1050, %v1052
      %v1083 = vmax.f32 %v1051, %v1053
      %v1084 = vmax.f32 %v1052, %v1054
      %v1085 = vmax.f32 %v1053, %v1055
      %v1086 = vmax.f32 %v1054, %v1056
      %v1087 = vmax.f32 %v1059, %v1031
      %v1088 = vmax.f32 %v1060, %v1032
      %v1089 = vmax.f32 %v1061, %v1033
      %v1090 = vmax.f32 %v1062, %v1034
      %v1091 = vmax.f32 %v1063, %v1035
      %v1092 = vmax.f32 %v1064, %v1036
      %v1093 = vmax.f32 %v1065, %v1037
      %v1094 = vmax.f32 %v1066, %v1038
      %v1095 = vmax.f32 %v1067, %v1039
      %v1096 = vmax.f32 %v1068, %v1040
      %v1097 = vmax.f32 %v1069, %v1041
      %v1098 = vmax.f32 %v1070, %v1042
      %v1099 = vmax.f32 %v1071, %v1043
      %v1100 = vmax.f32 %v1072, %v1044
      %v1101 = vmax.f32 %v1073, %v1045
      %v1102 = vmax.f32 %v1074, %v1046
      %v1103 = vmax.f32 %v1075, %v1047
      %v1104 = vmax.f32 %v1076, %v1048
      %v1105 = vmax.f32 %v1077, %v1049
      %v1106 = vmax.f32 %v1078, %v1050
      %v1107 = vmax.f32 %v1079, %v1051
      %v1108 = vmax.f32 %v1080, %v1052
      %v1109 = vmax.f32 %v1081, %v1053
      %v1110 = vmax.f32 %v1082, %v1054
      %v1111 = vmax.f32 %v1083, %v1055
      %v1112 = vmax.f32 %v1084, %v1056
      %v1113 = vmax.f32 %v1085, %v1057
      %v1114 = vmax.f32 %v1086, %v1058
      %v1115 = vmax.f32 %v1087, %v1033
      %v1116 = vmax.f32 %v1088, %v1034
      %v1117 = vmax.f32 %v1089, %v1035
      %v1118 = vmax.f32 %v1090, %v1036
      %v1119 = vmax.f32 %v1091, %v1037
      %v1120 = vmax.f32 %v1092, %v1038
      %v1121 = vmax.f32 %v1093, %v1039
      %v1122 = vmax.f32 %v1094, %v1040
      %v1123 = vmax.f32 %v1095, %v1041
      %v1124 = vmax.f32 %v1096, %v1042
      %v1125 = vmax.f32 %v1097, %v1043
      %v1126 = vmax.f32 %v1098, %v1044
      %v1127 = vmax.f32 %v1099, %v1045
      %v1128 = vmax.f32 %v1100, %v1046
      %v1129 = vmax.f32 %v1101, %v1047
      %v1130 = vmax.f32 %v1102, %v1048
      %v1131 = vmax.f32 %v1103, %v1049
      %v1132 = vmax.f32 %v1104, %v1050
      %v1133 = vmax.f32 %v1105, %v1051
      %v1134 = vmax.f32 %v1106, %v1052
      %v1135 = vmax.f32 %v1107, %v1053
      %v1136 = vmax.f32 %v1108, %v1054
      %v1137 = vmax.f32 %v1109, %v1055
      %v1138 = vmax.f32 %v1110, %v1056
      %v1139 = vmax.f32 %v1111, %v1057
      %v1140 = vmax.f32 %v1112, %v1058
      %v1141 = vmax.f32 %v1115, %v1035
      %v1142 = vmax.f32 %v1116, %v1036
      %v1143 = vmax.f32 %v1117, %v1037
      %v1144 = vmax.f32 %v1118, %v1038
      %v1145 = vmax.f32 %v1119, %v1039
      %v1146 = vmax.f32 %v1120, %v1040
      %v1147 = vmax.f32 %v1121, %v1041
      %v1148 = vmax.f32 %v1122, %v1042
      %v1149 = vmax.f32 %v1123, %v1043
      %v1150 = vmax.f32 %v1124, %v1044
      %v1151 = vmax.f32 %v1125, %v1045
      %v1152 = vmax.f32 %v1126, %v1046
      %v1153 = vmax.f32 %v1127, %v1047
      %v1154 = vmax.f32 %v1128, %v1048
      %v1155 = vmax.f32 %v1129, %v1049
      %v1156 = vmax.f32 %v1130, %v1050
      %v1157 = vmax.f32 %v1131, %v1051
      %v1158 = vmax.f32 %v1132, %v1052
      %v1159 = vmax.f32 %v1133, %v1053
      %v1160 = vmax.f32 %v1134, %v1054
      %v1161 = vmax.f32 %v1135, %v1055
      %v1162 = vmax.f32 %v1136, %v1056
      %v1163 = vmax.f32 %v1137, %v1057
      %v1164 = vmax.f32 %v1138, %v1058
      %v1197 = vrot.slane %v1087, 6
      %v1198 = vrot.slane %v1088, 6
      %v1199 = vsel %vm318, %v1197, %v1198
      %v1200 = vrot.slane %v1115, 6
      %v1201 = vrot.slane %v1116, 6
      %v1202 = vsel %vm318, %v1200, %v1201
      %v1203 = vrot.slane %v1141, 6
      %v1204 = vrot.slane %v1142, 6
      %v1205 = vsel %vm318, %v1203, %v1204
      %v1206 = vrot.slane %v1143, 6
      %v1207 = vrot.slane %v1144, 6
      %v1208 = vsel %vm318, %v1206, %v1207
      %v1209 = vrot.slane %v1145, 6
      %v1210 = vrot.slane %v1146, 6
      %v1211 = vsel %vm318, %v1209, %v1210
      %v1212 = vrot.slane %v1147, 6
      %v1213 = vrot.slane %v1148, 6
      %v1214 = vsel %vm318, %v1212, %v1213
      %v1215 = vrot.slane %v1149, 6
      %v1216 = vrot.slane %v1150, 6
      %v1217 = vsel %vm318, %v1215, %v1216
      %v1218 = vrot.slane %v1151, 6
      %v1219 = vrot.slane %v1152, 6
      %v1220 = vsel %vm318, %v1218, %v1219
      %v1221 = vrot.slane %v1153, 6
      %v1222 = vrot.slane %v1154, 6
      %v1223 = vsel %vm318, %v1221, %v1222
      %v1224 = vrot.slane %v1155, 6
      %v1225 = vrot.slane %v1156, 6
      %v1226 = vsel %vm318, %v1224, %v1225
      %v1227 = vrot.slane %v1157, 6
      %v1228 = vrot.slane %v1158, 6
      %v1229 = vsel %vm318, %v1227, %v1228
      %v1230 = vrot.slane %v1159, 6
      %v1231 = vrot.slane %v1160, 6
      %v1232 = vsel %vm318, %v1230, %v1231
      %v1233 = vrot.slane %v1161, 6
      %v1234 = vrot.slane %v1162, 6
      %v1235 = vsel %vm318, %v1233, %v1234
      %v1236 = vrot.slane %v1163, 6
      %v1237 = vrot.slane %v1164, 6
      %v1238 = vsel %vm318, %v1236, %v1237
      %v1239 = vrot.slane %v1139, 6
      %v1240 = vrot.slane %v1140, 6
      %v1241 = vsel %vm318, %v1239, %v1240
      %v1242 = vrot.slane %v1113, 6
      %v1243 = vrot.slane %v1114, 6
      %v1244 = vsel %vm318, %v1242, %v1243
      %v1293 = vsel %vm318, -inf, %v1197
      %v1294 = vsel %vm318, -inf, %v1200
      %v1295 = vsel %vm318, -inf, %v1203
      %v1296 = vsel %vm318, -inf, %v1206
      %v1297 = vsel %vm318, -inf, %v1209
      %v1298 = vsel %vm318, -inf, %v1212
      %v1299 = vsel %vm318, -inf, %v1215
      %v1300 = vsel %vm318, -inf, %v1218
      %v1301 = vsel %vm318, -inf, %v1221
      %v1302 = vsel %vm318, -inf, %v1224
      %v1303 = vsel %vm318, -inf, %v1227
      %v1304 = vsel %vm318, -inf, %v1230
      %v1305 = vsel %vm318, -inf, %v1233
      %v1306 = vsel %vm318, -inf, %v1236
      %v1307 = vsel %vm318, -inf, %v1239
      %v1308 = vsel %vm318, -inf, %v1242
      %v1309 = vsel %vm318, %v1198, -inf
      %v1310 = vsel %vm318, %v1201, -inf
      %v1311 = vsel %vm318, %v1204, -inf
      %v1312 = vsel %vm318, %v1207, -inf
      %v1313 = vsel %vm318, %v1210, -inf
      %v1314 = vsel %vm318, %v1213, -inf
      %v1315 = vsel %vm318, %v1216, -inf
      %v1316 = vsel %vm318, %v1219, -inf
      %v1317 = vsel %vm318, %v1222, -inf
      %v1318 = vsel %vm318, %v1225, -inf
      %v1319 = vsel %vm318, %v1228, -inf
      %v1320 = vsel %vm318, %v1231, -inf
      %v1321 = vsel %vm318, %v1234, -inf
      %v1322 = vsel %vm318, %v1237, -inf
      %v1323 = vsel %vm318, %v1240, -inf
      %v1324 = vsel %vm318, %v1243, -inf
      %v1357 = vrot.slane %v1293, 1
      %v1358 = vrot.slane %v1199, 1
      %v1359 = vsel %vm479, %v1357, %v1358
      %v1360 = vrot.slane %v1309, 1
      %v1361 = vsel %vm479, %v1358, %v1360
      %v1362 = vrot.slane %v1294, 1
      %v1363 = vrot.slane %v1202, 1
      %v1364 = vsel %vm479, %v1362, %v1363
      %v1365 = vrot.slane %v1310, 1
      %v1366 = vsel %vm479, %v1363, %v1365
      %v1367 = vrot.slane %v1295, 1
      %v1368 = vrot.slane %v1205, 1
      %v1369 = vsel %vm479, %v1367, %v1368
      %v1370 = vrot.slane %v1311, 1
      %v1371 = vsel %vm479, %v1368, %v1370
      %v1372 = vrot.slane %v1296, 1
      %v1373 = vrot.slane %v1208, 1
      %v1374 = vsel %vm479, %v1372, %v1373
      %v1375 = vrot.slane %v1312, 1
      %v1376 = vsel %vm479, %v1373, %v1375
      %v1377 = vrot.slane %v1297, 1
      %v1378 = vrot.slane %v1211, 1
      %v1379 = vsel %vm479, %v1377, %v1378
      %v1380 = vrot.slane %v1313, 1
      %v1381 = vsel %vm479, %v1378, %v1380
      %v1382 = vrot.slane %v1298, 1
      %v1383 = vrot.slane %v1214, 1
      %v1384 = vsel %vm479, %v1382, %v1383
      %v1385 = vrot.slane %v1314, 1
      %v1386 = vsel %vm479, %v1383, %v1385
      %v1387 = vrot.slane %v1299, 1
      %v1388 = vrot.slane %v1217, 1
      %v1389 = vsel %vm479, %v1387, %v1388
      %v1390 = vrot.slane %v1315, 1
      %v1391 = vsel %vm479, %v1388, %v1390
      %v1392 = vrot.slane %v1300, 1
      %v1393 = vrot.slane %v1220, 1
      %v1394 = vsel %vm479, %v1392, %v1393
      %v1395 = vrot.slane %v1316, 1
      %v1396 = vsel %vm479, %v1393, %v1395
      %v1397 = vrot.slane %v1301, 1
      %v1398 = vrot.slane %v1223, 1
      %v1399 = vsel %vm479, %v1397, %v1398
      %v1400 = vrot.slane %v1317, 1
      %v1401 = vsel %vm479, %v1398, %v1400
      %v1402 = vrot.slane %v1302, 1
      %v1403 = vrot.slane %v1226, 1
      %v1404 = vsel %vm479, %v1402, %v1403
      %v1405 = vrot.slane %v1318, 1
      %v1406 = vsel %vm479, %v1403, %v1405
      %v1407 = vrot.slane %v1303, 1
      %v1408 = vrot.slane %v1229, 1
      %v1409 = vsel %vm479, %v1407, %v1408
      %v1410 = vrot.slane %v1319, 1
      %v1411 = vsel %vm479, %v1408, %v1410
      %v1412 = vrot.slane %v1304, 1
      %v1413 = vrot.slane %v1232, 1
      %v1414 = vsel %vm479, %v1412, %v1413
      %v1415 = vrot.slane %v1320, 1
      %v1416 = vsel %vm479, %v1413, %v1415
      %v1417 = vrot.slane %v1305, 1
      %v1418 = vrot.slane %v1235, 1
      %v1419 = vsel %vm479, %v1417, %v1418
      %v1420 = vrot.slane %v1321, 1
      %v1421 = vsel %vm479, %v1418, %v1420
      %v1422 = vrot.slane %v1306, 1
      %v1423 = vrot.slane %v1238, 1
      %v1424 = vsel %vm479, %v1422, %v1423
      %v1425 = vrot.slane %v1322, 1
      %v1426 = vsel %vm479, %v1423, %v1425
      %v1427 = vrot.slane %v1307, 1
      %v1428 = vrot.slane %v1241, 1
      %v1429 = vsel %vm479, %v1427, %v1428
      %v1430 = vrot.slane %v1323, 1
      %v1431 = vsel %vm479, %v1428, %v1430
      %v1432 = vrot.slane %v1308, 1
      %v1433 = vrot.slane %v1244, 1
      %v1434 = vsel %vm479, %v1432, %v1433
      %v1435 = vrot.slane %v1324, 1
      %v1436 = vsel %vm479, %v1433, %v1435
      %v1469 = vmax.f32 %v1293, %v1359
      %v1470 = vmax.f32 %v1199, %v1361
      %v1471 = vmax.f32 %v1294, %v1364
      %v1472 = vmax.f32 %v1202, %v1366
      %v1473 = vmax.f32 %v1295, %v1369
      %v1474 = vmax.f32 %v1205, %v1371
      %v1475 = vmax.f32 %v1296, %v1374
      %v1476 = vmax.f32 %v1208, %v1376
      %v1477 = vmax.f32 %v1297, %v1379
      %v1478 = vmax.f32 %v1211, %v1381
      %v1479 = vmax.f32 %v1298, %v1384
      %v1480 = vmax.f32 %v1214, %v1386
      %v1481 = vmax.f32 %v1299, %v1389
      %v1482 = vmax.f32 %v1217, %v1391
      %v1483 = vmax.f32 %v1300, %v1394
      %v1484 = vmax.f32 %v1220, %v1396
      %v1485 = vmax.f32 %v1301, %v1399
      %v1486 = vmax.f32 %v1223, %v1401
      %v1487 = vmax.f32 %v1302, %v1404
      %v1488 = vmax.f32 %v1226, %v1406
      %v1489 = vmax.f32 %v1303, %v1409
      %v1490 = vmax.f32 %v1229, %v1411
      %v1491 = vmax.f32 %v1304, %v1414
      %v1492 = vmax.f32 %v1232, %v1416
      %v1493 = vmax.f32 %v1305, %v1419
      %v1494 = vmax.f32 %v1235, %v1421
      %v1495 = vmax.f32 %v1306, %v1424
      %v1496 = vmax.f32 %v1238, %v1426
      %v1497 = vmax.f32 %v1307, %v1429
      %v1498 = vmax.f32 %v1241, %v1431
      %v1499 = vmax.f32 %v1308, %v1434
      %v1500 = vmax.f32 %v1244, %v1436
      %v1501 = vrot.slane %v1293, 2
      %v1502 = vrot.slane %v1199, 2
      %v1503 = vsel %vm624, %v1501, %v1502
      %v1504 = vrot.slane %v1309, 2
      %v1505 = vsel %vm624, %v1502, %v1504
      %v1506 = vrot.slane %v1294, 2
      %v1507 = vrot.slane %v1202, 2
      %v1508 = vsel %vm624, %v1506, %v1507
      %v1509 = vrot.slane %v1310, 2
      %v1510 = vsel %vm624, %v1507, %v1509
      %v1511 = vrot.slane %v1295, 2
      %v1512 = vrot.slane %v1205, 2
      %v1513 = vsel %vm624, %v1511, %v1512
      %v1514 = vrot.slane %v1311, 2
      %v1515 = vsel %vm624, %v1512, %v1514
      %v1516 = vrot.slane %v1296, 2
      %v1517 = vrot.slane %v1208, 2
      %v1518 = vsel %vm624, %v1516, %v1517
      %v1519 = vrot.slane %v1312, 2
      %v1520 = vsel %vm624, %v1517, %v1519
      %v1521 = vrot.slane %v1297, 2
      %v1522 = vrot.slane %v1211, 2
      %v1523 = vsel %vm624, %v1521, %v1522
      %v1524 = vrot.slane %v1313, 2
      %v1525 = vsel %vm624, %v1522, %v1524
      %v1526 = vrot.slane %v1298, 2
      %v1527 = vrot.slane %v1214, 2
      %v1528 = vsel %vm624, %v1526, %v1527
      %v1529 = vrot.slane %v1314, 2
      %v1530 = vsel %vm624, %v1527, %v1529
      %v1531 = vrot.slane %v1299, 2
      %v1532 = vrot.slane %v1217, 2
      %v1533 = vsel %vm624, %v1531, %v1532
      %v1534 = vrot.slane %v1315, 2
      %v1535 = vsel %vm624, %v1532, %v1534
      %v1536 = vrot.slane %v1300, 2
      %v1537 = vrot.slane %v1220, 2
      %v1538 = vsel %vm624, %v1536, %v1537
      %v1539 = vrot.slane %v1316, 2
      %v1540 = vsel %vm624, %v1537, %v1539
      %v1541 = vrot.slane %v1301, 2
      %v1542 = vrot.slane %v1223, 2
      %v1543 = vsel %vm624, %v1541, %v1542
      %v1544 = vrot.slane %v1317, 2
      %v1545 = vsel %vm624, %v1542, %v1544
      %v1546 = vrot.slane %v1302, 2
      %v1547 = vrot.slane %v1226, 2
      %v1548 = vsel %vm624, %v1546, %v1547
      %v1549 = vrot.slane %v1318, 2
      %v1550 = vsel %vm624, %v1547, %v1549
      %v1551 = vrot.slane %v1303, 2
      %v1552 = vrot.slane %v1229, 2
      %v1553 = vsel %vm624, %v1551, %v1552
      %v1554 = vrot.slane %v1319, 2
      %v1555 = vsel %vm624, %v1552, %v1554
      %v1556 = vrot.slane %v1304, 2
      %v1557 = vrot.slane %v1232, 2
      %v1558 = vsel %vm624, %v1556, %v1557
      %v1559 = vrot.slane %v1320, 2
      %v1560 = vsel %vm624, %v1557, %v1559
      %v1561 = vrot.slane %v1305, 2
      %v1562 = vrot.slane %v1235, 2
      %v1563 = vsel %vm624, %v1561, %v1562
      %v1564 = vrot.slane %v1321, 2
      %v1565 = vsel %vm624, %v1562, %v1564
      %v1566 = vrot.slane %v1306, 2
      %v1567 = vrot.slane %v1238, 2
      %v1568 = vsel %vm624, %v1566, %v1567
      %v1569 = vrot.slane %v1322, 2
      %v1570 = vsel %vm624, %v1567, %v1569
      %v1571 = vrot.slane %v1307, 2
      %v1572 = vrot.slane %v1241, 2
      %v1573 = vsel %vm624, %v1571, %v1572
      %v1574 = vrot.slane %v1323, 2
      %v1575 = vsel %vm624, %v1572, %v1574
      %v1576 = vrot.slane %v1308, 2
      %v1577 = vrot.slane %v1244, 2
      %v1578 = vsel %vm624, %v1576, %v1577
      %v1579 = vrot.slane %v1324, 2
      %v1580 = vsel %vm624, %v1577, %v1579
      %v1613 = vmax.f32 %v1469, %v1503
      %v1614 = vmax.f32 %v1470, %v1505
      %v1615 = vmax.f32 %v1471, %v1508
      %v1616 = vmax.f32 %v1472, %v1510
      %v1617 = vmax.f32 %v1473, %v1513
      %v1618 = vmax.f32 %v1474, %v1515
      %v1619 = vmax.f32 %v1475, %v1518
      %v1620 = vmax.f32 %v1476, %v1520
      %v1621 = vmax.f32 %v1477, %v1523
      %v1622 = vmax.f32 %v1478, %v1525
      %v1623 = vmax.f32 %v1479, %v1528
      %v1624 = vmax.f32 %v1480, %v1530
      %v1625 = vmax.f32 %v1481, %v1533
      %v1626 = vmax.f32 %v1482, %v1535
      %v1627 = vmax.f32 %v1483, %v1538
      %v1628 = vmax.f32 %v1484, %v1540
      %v1629 = vmax.f32 %v1485, %v1543
      %v1630 = vmax.f32 %v1486, %v1545
      %v1631 = vmax.f32 %v1487, %v1548
      %v1632 = vmax.f32 %v1488, %v1550
      %v1633 = vmax.f32 %v1489, %v1553
      %v1634 = vmax.f32 %v1490, %v1555
      %v1635 = vmax.f32 %v1491, %v1558
      %v1636 = vmax.f32 %v1492, %v1560
      %v1637 = vmax.f32 %v1493, %v1563
      %v1638 = vmax.f32 %v1494, %v1565
      %v1639 = vmax.f32 %v1495, %v1568
      %v1640 = vmax.f32 %v1496, %v1570
      %v1641 = vmax.f32 %v1497, %v1573
      %v1642 = vmax.f32 %v1498, %v1575
      %v1643 = vmax.f32 %v1499, %v1578
      %v1644 = vmax.f32 %v1500, %v1580
      %v1645 = vrot.slane %v1293, 3
      %v1646 = vrot.slane %v1199, 3
      %v1647 = vsel %vm769, %v1645, %v1646
      %v1648 = vrot.slane %v1309, 3
      %v1649 = vsel %vm769, %v1646, %v1648
      %v1650 = vrot.slane %v1294, 3
      %v1651 = vrot.slane %v1202, 3
      %v1652 = vsel %vm769, %v1650, %v1651
      %v1653 = vrot.slane %v1310, 3
      %v1654 = vsel %vm769, %v1651, %v1653
      %v1655 = vrot.slane %v1295, 3
      %v1656 = vrot.slane %v1205, 3
      %v1657 = vsel %vm769, %v1655, %v1656
      %v1658 = vrot.slane %v1311, 3
      %v1659 = vsel %vm769, %v1656, %v1658
      %v1660 = vrot.slane %v1296, 3
      %v1661 = vrot.slane %v1208, 3
      %v1662 = vsel %vm769, %v1660, %v1661
      %v1663 = vrot.slane %v1312, 3
      %v1664 = vsel %vm769, %v1661, %v1663
      %v1665 = vrot.slane %v1297, 3
      %v1666 = vrot.slane %v1211, 3
      %v1667 = vsel %vm769, %v1665, %v1666
      %v1668 = vrot.slane %v1313, 3
      %v1669 = vsel %vm769, %v1666, %v1668
      %v1670 = vrot.slane %v1298, 3
      %v1671 = vrot.slane %v1214, 3
      %v1672 = vsel %vm769, %v1670, %v1671
      %v1673 = vrot.slane %v1314, 3
      %v1674 = vsel %vm769, %v1671, %v1673
      %v1675 = vrot.slane %v1299, 3
      %v1676 = vrot.slane %v1217, 3
      %v1677 = vsel %vm769, %v1675, %v1676
      %v1678 = vrot.slane %v1315, 3
      %v1679 = vsel %vm769, %v1676, %v1678
      %v1680 = vrot.slane %v1300, 3
      %v1681 = vrot.slane %v1220, 3
      %v1682 = vsel %vm769, %v1680, %v1681
      %v1683 = vrot.slane %v1316, 3
      %v1684 = vsel %vm769, %v1681, %v1683
      %v1685 = vrot.slane %v1301, 3
      %v1686 = vrot.slane %v1223, 3
      %v1687 = vsel %vm769, %v1685, %v1686
      %v1688 = vrot.slane %v1317, 3
      %v1689 = vsel %vm769, %v1686, %v1688
      %v1690 = vrot.slane %v1302, 3
      %v1691 = vrot.slane %v1226, 3
      %v1692 = vsel %vm769, %v1690, %v1691
      %v1693 = vrot.slane %v1318, 3
      %v1694 = vsel %vm769, %v1691, %v1693
      %v1695 = vrot.slane %v1303, 3
      %v1696 = vrot.slane %v1229, 3
      %v1697 = vsel %vm769, %v1695, %v1696
      %v1698 = vrot.slane %v1319, 3
      %v1699 = vsel %vm769, %v1696, %v1698
      %v1700 = vrot.slane %v1304, 3
      %v1701 = vrot.slane %v1232, 3
      %v1702 = vsel %vm769, %v1700, %v1701
      %v1703 = vrot.slane %v1320, 3
      %v1704 = vsel %vm769, %v1701, %v1703
      %v1705 = vrot.slane %v1305, 3
      %v1706 = vrot.slane %v1235, 3
      %v1707 = vsel %vm769, %v1705, %v1706
      %v1708 = vrot.slane %v1321, 3
      %v1709 = vsel %vm769, %v1706, %v1708
      %v1710 = vrot.slane %v1306, 3
      %v1711 = vrot.slane %v1238, 3
      %v1712 = vsel %vm769, %v1710, %v1711
      %v1713 = vrot.slane %v1322, 3
      %v1714 = vsel %vm769, %v1711, %v1713
      %v1715 = vrot.slane %v1307, 3
      %v1716 = vrot.slane %v1241, 3
      %v1717 = vsel %vm769, %v1715, %v1716
      %v1718 = vrot.slane %v1323, 3
      %v1719 = vsel %vm769, %v1716, %v1718
      %v1720 = vrot.slane %v1308, 3
      %v1721 = vrot.slane %v1244, 3
      %v1722 = vsel %vm769, %v1720, %v1721
      %v1723 = vrot.slane %v1324, 3
      %v1724 = vsel %vm769, %v1721, %v1723
      %v1757 = vmax.f32 %v1613, %v1647
      %v1758 = vmax.f32 %v1614, %v1649
      %v1759 = vmax.f32 %v1615, %v1652
      %v1760 = vmax.f32 %v1616, %v1654
      %v1761 = vmax.f32 %v1617, %v1657
      %v1762 = vmax.f32 %v1618, %v1659
      %v1763 = vmax.f32 %v1619, %v1662
      %v1764 = vmax.f32 %v1620, %v1664
      %v1765 = vmax.f32 %v1621, %v1667
      %v1766 = vmax.f32 %v1622, %v1669
      %v1767 = vmax.f32 %v1623, %v1672
      %v1768 = vmax.f32 %v1624, %v1674
      %v1769 = vmax.f32 %v1625, %v1677
      %v1770 = vmax.f32 %v1626, %v1679
      %v1771 = vmax.f32 %v1627, %v1682
      %v1772 = vmax.f32 %v1628, %v1684
      %v1773 = vmax.f32 %v1629, %v1687
      %v1774 = vmax.f32 %v1630, %v1689
      %v1775 = vmax.f32 %v1631, %v1692
      %v1776 = vmax.f32 %v1632, %v1694
      %v1777 = vmax.f32 %v1633, %v1697
      %v1778 = vmax.f32 %v1634, %v1699
      %v1779 = vmax.f32 %v1635, %v1702
      %v1780 = vmax.f32 %v1636, %v1704
      %v1781 = vmax.f32 %v1637, %v1707
      %v1782 = vmax.f32 %v1638, %v1709
      %v1783 = vmax.f32 %v1639, %v1712
      %v1784 = vmax.f32 %v1640, %v1714
      %v1785 = vmax.f32 %v1641, %v1717
      %v1786 = vmax.f32 %v1642, %v1719
      %v1787 = vmax.f32 %v1643, %v1722
      %v1788 = vmax.f32 %v1644, %v1724
      %v1789 = vrot.slane %v1293, 4
      %v1790 = vrot.slane %v1199, 4
      %v1791 = vsel %vm914, %v1789, %v1790
      %v1792 = vrot.slane %v1309, 4
      %v1793 = vsel %vm914, %v1790, %v1792
      %v1794 = vrot.slane %v1294, 4
      %v1795 = vrot.slane %v1202, 4
      %v1796 = vsel %vm914, %v1794, %v1795
      %v1797 = vrot.slane %v1310, 4
      %v1798 = vsel %vm914, %v1795, %v1797
      %v1799 = vrot.slane %v1295, 4
      %v1800 = vrot.slane %v1205, 4
      %v1801 = vsel %vm914, %v1799, %v1800
      %v1802 = vrot.slane %v1311, 4
      %v1803 = vsel %vm914, %v1800, %v1802
      %v1804 = vrot.slane %v1296, 4
      %v1805 = vrot.slane %v1208, 4
      %v1806 = vsel %vm914, %v1804, %v1805
      %v1807 = vrot.slane %v1312, 4
      %v1808 = vsel %vm914, %v1805, %v1807
      %v1809 = vrot.slane %v1297, 4
      %v1810 = vrot.slane %v1211, 4
      %v1811 = vsel %vm914, %v1809, %v1810
      %v1812 = vrot.slane %v1313, 4
      %v1813 = vsel %vm914, %v1810, %v1812
      %v1814 = vrot.slane %v1298, 4
      %v1815 = vrot.slane %v1214, 4
      %v1816 = vsel %vm914, %v1814, %v1815
      %v1817 = vrot.slane %v1314, 4
      %v1818 = vsel %vm914, %v1815, %v1817
      %v1819 = vrot.slane %v1299, 4
      %v1820 = vrot.slane %v1217, 4
      %v1821 = vsel %vm914, %v1819, %v1820
      %v1822 = vrot.slane %v1315, 4
      %v1823 = vsel %vm914, %v1820, %v1822
      %v1824 = vrot.slane %v1300, 4
      %v1825 = vrot.slane %v1220, 4
      %v1826 = vsel %vm914, %v1824, %v1825
      %v1827 = vrot.slane %v1316, 4
      %v1828 = vsel %vm914, %v1825, %v1827
      %v1829 = vrot.slane %v1301, 4
      %v1830 = vrot.slane %v1223, 4
      %v1831 = vsel %vm914, %v1829, %v1830
      %v1832 = vrot.slane %v1317, 4
      %v1833 = vsel %vm914, %v1830, %v1832
      %v1834 = vrot.slane %v1302, 4
      %v1835 = vrot.slane %v1226, 4
      %v1836 = vsel %vm914, %v1834, %v1835
      %v1837 = vrot.slane %v1318, 4
      %v1838 = vsel %vm914, %v1835, %v1837
      %v1839 = vrot.slane %v1303, 4
      %v1840 = vrot.slane %v1229, 4
      %v1841 = vsel %vm914, %v1839, %v1840
      %v1842 = vrot.slane %v1319, 4
      %v1843 = vsel %vm914, %v1840, %v1842
      %v1844 = vrot.slane %v1304, 4
      %v1845 = vrot.slane %v1232, 4
      %v1846 = vsel %vm914, %v1844, %v1845
      %v1847 = vrot.slane %v1320, 4
      %v1848 = vsel %vm914, %v1845, %v1847
      %v1849 = vrot.slane %v1305, 4
      %v1850 = vrot.slane %v1235, 4
      %v1851 = vsel %vm914, %v1849, %v1850
      %v1852 = vrot.slane %v1321, 4
      %v1853 = vsel %vm914, %v1850, %v1852
      %v1854 = vrot.slane %v1306, 4
      %v1855 = vrot.slane %v1238, 4
      %v1856 = vsel %vm914, %v1854, %v1855
      %v1857 = vrot.slane %v1322, 4
      %v1858 = vsel %vm914, %v1855, %v1857
      %v1859 = vrot.slane %v1307, 4
      %v1860 = vrot.slane %v1241, 4
      %v1861 = vsel %vm914, %v1859, %v1860
      %v1862 = vrot.slane %v1323, 4
      %v1863 = vsel %vm914, %v1860, %v1862
      %v1864 = vrot.slane %v1308, 4
      %v1865 = vrot.slane %v1244, 4
      %v1866 = vsel %vm914, %v1864, %v1865
      %v1867 = vrot.slane %v1324, 4
      %v1868 = vsel %vm914, %v1865, %v1867
      %v1901 = vmax.f32 %v1757, %v1791
      %v1902 = vmax.f32 %v1758, %v1793
      %v1903 = vmax.f32 %v1759, %v1796
      %v1904 = vmax.f32 %v1760, %v1798
      %v1905 = vmax.f32 %v1761, %v1801
      %v1906 = vmax.f32 %v1762, %v1803
      %v1907 = vmax.f32 %v1763, %v1806
      %v1908 = vmax.f32 %v1764, %v1808
      %v1909 = vmax.f32 %v1765, %v1811
      %v1910 = vmax.f32 %v1766, %v1813
      %v1911 = vmax.f32 %v1767, %v1816
      %v1912 = vmax.f32 %v1768, %v1818
      %v1913 = vmax.f32 %v1769, %v1821
      %v1914 = vmax.f32 %v1770, %v1823
      %v1915 = vmax.f32 %v1771, %v1826
      %v1916 = vmax.f32 %v1772, %v1828
      %v1917 = vmax.f32 %v1773, %v1831
      %v1918 = vmax.f32 %v1774, %v1833
      %v1919 = vmax.f32 %v1775, %v1836
      %v1920 = vmax.f32 %v1776, %v1838
      %v1921 = vmax.f32 %v1777, %v1841
      %v1922 = vmax.f32 %v1778, %v1843
      %v1923 = vmax.f32 %v1779, %v1846
      %v1924 = vmax.f32 %v1780, %v1848
      %v1925 = vmax.f32 %v1781, %v1851
      %v1926 = vmax.f32 %v1782, %v1853
      %v1927 = vmax.f32 %v1783, %v1856
      %v1928 = vmax.f32 %v1784, %v1858
      %v1929 = vmax.f32 %v1785, %v1861
      %v1930 = vmax.f32 %v1786, %v1863
      %v1931 = vmax.f32 %v1787, %v1866
      %v1932 = vmax.f32 %v1788, %v1868
      %v1933 = vmax.f32 %v1901, %v1903
      %v1934 = vmax.f32 %v1902, %v1904
      %v1935 = vmax.f32 %v1903, %v1905
      %v1936 = vmax.f32 %v1904, %v1906
      %v1937 = vmax.f32 %v1905, %v1907
      %v1938 = vmax.f32 %v1906, %v1908
      %v1939 = vmax.f32 %v1907, %v1909
      %v1940 = vmax.f32 %v1908, %v1910
      %v1941 = vmax.f32 %v1909, %v1911
      %v1942 = vmax.f32 %v1910, %v1912
      %v1943 = vmax.f32 %v1911, %v1913
      %v1944 = vmax.f32 %v1912, %v1914
      %v1945 = vmax.f32 %v1913, %v1915
      %v1946 = vmax.f32 %v1914, %v1916
      %v1947 = vmax.f32 %v1915, %v1917
      %v1948 = vmax.f32 %v1916, %v1918
      %v1949 = vmax.f32 %v1917, %v1919
      %v1950 = vmax.f32 %v1918, %v1920
      %v1951 = vmax.f32 %v1919, %v1921
      %v1952 = vmax.f32 %v1920, %v1922
      %v1953 = vmax.f32 %v1921, %v1923
      %v1954 = vmax.f32 %v1922, %v1924
      %v1955 = vmax.f32 %v1923, %v1925
      %v1956 = vmax.f32 %v1924, %v1926
      %v1957 = vmax.f32 %v1925, %v1927
      %v1958 = vmax.f32 %v1926, %v1928
      %v1959 = vmax.f32 %v1927, %v1929
      %v1960 = vmax.f32 %v1928, %v1930
      %v1961 = vmax.f32 %v1933, %v1905
      %v1962 = vmax.f32 %v1934, %v1906
      %v1963 = vmax.f32 %v1935, %v1907
      %v1964 = vmax.f32 %v1936, %v1908
      %v1965 = vmax.f32 %v1937, %v1909
      %v1966 = vmax.f32 %v1938, %v1910
      %v1967 = vmax.f32 %v1939, %v1911
      %v1968 = vmax.f32 %v1940, %v1912
      %v1969 = vmax.f32 %v1941, %v1913
      %v1970 = vmax.f32 %v1942, %v1914
      %v1971 = vmax.f32 %v1943, %v1915
      %v1972 = vmax.f32 %v1944, %v1916
      %v1973 = vmax.f32 %v1945, %v1917
      %v1974 = vmax.f32 %v1946, %v1918
      %v1975 = vmax.f32 %v1947, %v1919
      %v1976 = vmax.f32 %v1948, %v1920
      %v1977 = vmax.f32 %v1949, %v1921
      %v1978 = vmax.f32 %v1950, %v1922
      %v1979 = vmax.f32 %v1951, %v1923
      %v1980 = vmax.f32 %v1952, %v1924
      %v1981 = vmax.f32 %v1953, %v1925
      %v1982 = vmax.f32 %v1954, %v1926
      %v1983 = vmax.f32 %v1955, %v1927
      %v1984 = vmax.f32 %v1956, %v1928
      %v1985 = vmax.f32 %v1957, %v1929
      %v1986 = vmax.f32 %v1958, %v1930
      %v1987 = vmax.f32 %v1959, %v1931
      %v1988 = vmax.f32 %v1960, %v1932
      %v1989 = vmax.f32 %v1961, %v1907
      %v1990 = vmax.f32 %v1962, %v1908
      %v1991 = vmax.f32 %v1963, %v1909
      %v1992 = vmax.f32 %v1964, %v1910
      %v1993 = vmax.f32 %v1965, %v1911
      %v1994 = vmax.f32 %v1966, %v1912
      %v1995 = vmax.f32 %v1967, %v1913
      %v1996 = vmax.f32 %v1968, %v1914
      %v1997 = vmax.f32 %v1969, %v1915
      %v1998 = vmax.f32 %v1970, %v1916
      %v1999 = vmax.f32 %v1971, %v1917
      %v2000 = vmax.f32 %v1972, %v1918
      %v2001 = vmax.f32 %v1973, %v1919
      %v2002 = vmax.f32 %v1974, %v1920
      %v2003 = vmax.f32 %v1975, %v1921
      %v2004 = vmax.f32 %v1976, %v1922
      %v2005 = vmax.f32 %v1977, %v1923
      %v2006 = vmax.f32 %v1978, %v1924
      %v2007 = vmax.f32 %v1979, %v1925
      %v2008 = vmax.f32 %v1980, %v1926
      %v2009 = vmax.f32 %v1981, %v1927
      %v2010 = vmax.f32 %v1982, %v1928
      %v2011 = vmax.f32 %v1983, %v1929
      %v2012 = vmax.f32 %v1984, %v1930
      %v2013 = vmax.f32 %v1985, %v1931
      %v2014 = vmax.f32 %v1986, %v1932
      %v2015 = vmax.f32 %v1989, %v1909
      %v2016 = vmax.f32 %v1990, %v1910
      %v2017 = vmax.f32 %v1991, %v1911
      %v2018 = vmax.f32 %v1992, %v1912
      %v2019 = vmax.f32 %v1993, %v1913
      %v2020 = vmax.f32 %v1994, %v1914
      %v2021 = vmax.f32 %v1995, %v1915
      %v2022 = vmax.f32 %v1996, %v1916
      %v2023 = vmax.f32 %v1997, %v1917
      %v2024 = vmax.f32 %v1998, %v1918
      %v2025 = vmax.f32 %v1999, %v1919
      %v2026 = vmax.f32 %v2000, %v1920
      %v2027 = vmax.f32 %v2001, %v1921
      %v2028 = vmax.f32 %v2002, %v1922
      %v2029 = vmax.f32 %v2003, %v1923
      %v2030 = vmax.f32 %v2004, %v1924
      %v2031 = vmax.f32 %v2005, %v1925
      %v2032 = vmax.f32 %v2006, %v1926
      %v2033 = vmax.f32 %v2007, %v1927
      %v2034 = vmax.f32 %v2008, %v1928
      %v2035 = vmax.f32 %v2009, %v1929
      %v2036 = vmax.f32 %v2010, %v1930
      %v2037 = vmax.f32 %v2011, %v1931
      %v2038 = vmax.f32 %v2012, %v1932
      %v2071 = vrot.slane %v1961, 6
      %v2072 = vrot.slane %v1962, 6
      %v2073 = vsel %vm318, %v2071, %v2072
      %v2074 = vrot.slane %v1989, 6
      %v2075 = vrot.slane %v1990, 6
      %v2076 = vsel %vm318, %v2074, %v2075
      %v2077 = vrot.slane %v2015, 6
      %v2078 = vrot.slane %v2016, 6
      %v2079 = vsel %vm318, %v2077, %v2078
      %v2080 = vrot.slane %v2017, 6
      %v2081 = vrot.slane %v2018, 6
      %v2082 = vsel %vm318, %v2080, %v2081
      %v2083 = vrot.slane %v2019, 6
      %v2084 = vrot.slane %v2020, 6
      %v2085 = vsel %vm318, %v2083, %v2084
      %v2086 = vrot.slane %v2021, 6
      %v2087 = vrot.slane %v2022, 6
      %v2088 = vsel %vm318, %v2086, %v2087
      %v2089 = vrot.slane %v2023, 6
      %v2090 = vrot.slane %v2024, 6
      %v2091 = vsel %vm318, %v2089, %v2090
      %v2092 = vrot.slane %v2025, 6
      %v2093 = vrot.slane %v2026, 6
      %v2094 = vsel %vm318, %v2092, %v2093
      %v2095 = vrot.slane %v2027, 6
      %v2096 = vrot.slane %v2028, 6
      %v2097 = vsel %vm318, %v2095, %v2096
      %v2098 = vrot.slane %v2029, 6
      %v2099 = vrot.slane %v2030, 6
      %v2100 = vsel %vm318, %v2098, %v2099
      %v2101 = vrot.slane %v2031, 6
      %v2102 = vrot.slane %v2032, 6
      %v2103 = vsel %vm318, %v2101, %v2102
      %v2104 = vrot.slane %v2033, 6
      %v2105 = vrot.slane %v2034, 6
      %v2106 = vsel %vm318, %v2104, %v2105
      %v2107 = vrot.slane %v2035, 6
      %v2108 = vrot.slane %v2036, 6
      %v2109 = vsel %vm318, %v2107, %v2108
      %v2110 = vrot.slane %v2037, 6
      %v2111 = vrot.slane %v2038, 6
      %v2112 = vsel %vm318, %v2110, %v2111
      %v2113 = vrot.slane %v2013, 6
      %v2114 = vrot.slane %v2014, 6
      %v2115 = vsel %vm318, %v2113, %v2114
      %v2116 = vrot.slane %v1987, 6
      %v2117 = vrot.slane %v1988, 6
      %v2118 = vsel %vm318, %v2116, %v2117
      %v2167 = vsel %vm318, -inf, %v2071
      %v2168 = vsel %vm318, -inf, %v2074
      %v2169 = vsel %vm318, -inf, %v2077
      %v2170 = vsel %vm318, -inf, %v2080
      %v2171 = vsel %vm318, -inf, %v2083
      %v2172 = vsel %vm318, -inf, %v2086
      %v2173 = vsel %vm318, -inf, %v2089
      %v2174 = vsel %vm318, -inf, %v2092
      %v2175 = vsel %vm318, -inf, %v2095
      %v2176 = vsel %vm318, -inf, %v2098
      %v2177 = vsel %vm318, -inf, %v2101
      %v2178 = vsel %vm318, -inf, %v2104
      %v2179 = vsel %vm318, -inf, %v2107
      %v2180 = vsel %vm318, -inf, %v2110
      %v2181 = vsel %vm318, -inf, %v2113
      %v2182 = vsel %vm318, -inf, %v2116
      %v2183 = vsel %vm318, %v2072, -inf
      %v2184 = vsel %vm318, %v2075, -inf
      %v2185 = vsel %vm318, %v2078, -inf
      %v2186 = vsel %vm318, %v2081, -inf
      %v2187 = vsel %vm318, %v2084, -inf
      %v2188 = vsel %vm318, %v2087, -inf
      %v2189 = vsel %vm318, %v2090, -inf
      %v2190 = vsel %vm318, %v2093, -inf
      %v2191 = vsel %vm318, %v2096, -inf
      %v2192 = vsel %vm318, %v2099, -inf
      %v2193 = vsel %vm318, %v2102, -inf
      %v2194 = vsel %vm318, %v2105, -inf
      %v2195 = vsel %vm318, %v2108, -inf
      %v2196 = vsel %vm318, %v2111, -inf
      %v2197 = vsel %vm318, %v2114, -inf
      %v2198 = vsel %vm318, %v2117, -inf
      %v2231 = vrot.slane %v2167, 1
      %v2232 = vrot.slane %v2073, 1
      %v2233 = vsel %vm479, %v2231, %v2232
      %v2234 = vrot.slane %v2183, 1
      %v2235 = vsel %vm479, %v2232, %v2234
      %v2236 = vrot.slane %v2168, 1
      %v2237 = vrot.slane %v2076, 1
      %v2238 = vsel %vm479, %v2236, %v2237
      %v2239 = vrot.slane %v2184, 1
      %v2240 = vsel %vm479, %v2237, %v2239
      %v2241 = vrot.slane %v2169, 1
      %v2242 = vrot.slane %v2079, 1
      %v2243 = vsel %vm479, %v2241, %v2242
      %v2244 = vrot.slane %v2185, 1
      %v2245 = vsel %vm479, %v2242, %v2244
      %v2246 = vrot.slane %v2170, 1
      %v2247 = vrot.slane %v2082, 1
      %v2248 = vsel %vm479, %v2246, %v2247
      %v2249 = vrot.slane %v2186, 1
      %v2250 = vsel %vm479, %v2247, %v2249
      %v2251 = vrot.slane %v2171, 1
      %v2252 = vrot.slane %v2085, 1
      %v2253 = vsel %vm479, %v2251, %v2252
      %v2254 = vrot.slane %v2187, 1
      %v2255 = vsel %vm479, %v2252, %v2254
      %v2256 = vrot.slane %v2172, 1
      %v2257 = vrot.slane %v2088, 1
      %v2258 = vsel %vm479, %v2256, %v2257
      %v2259 = vrot.slane %v2188, 1
      %v2260 = vsel %vm479, %v2257, %v2259
      %v2261 = vrot.slane %v2173, 1
      %v2262 = vrot.slane %v2091, 1
      %v2263 = vsel %vm479, %v2261, %v2262
      %v2264 = vrot.slane %v2189, 1
      %v2265 = vsel %vm479, %v2262, %v2264
      %v2266 = vrot.slane %v2174, 1
      %v2267 = vrot.slane %v2094, 1
      %v2268 = vsel %vm479, %v2266, %v2267
      %v2269 = vrot.slane %v2190, 1
      %v2270 = vsel %vm479, %v2267, %v2269
      %v2271 = vrot.slane %v2175, 1
      %v2272 = vrot.slane %v2097, 1
      %v2273 = vsel %vm479, %v2271, %v2272
      %v2274 = vrot.slane %v2191, 1
      %v2275 = vsel %vm479, %v2272, %v2274
      %v2276 = vrot.slane %v2176, 1
      %v2277 = vrot.slane %v2100, 1
      %v2278 = vsel %vm479, %v2276, %v2277
      %v2279 = vrot.slane %v2192, 1
      %v2280 = vsel %vm479, %v2277, %v2279
      %v2281 = vrot.slane %v2177, 1
      %v2282 = vrot.slane %v2103, 1
      %v2283 = vsel %vm479, %v2281, %v2282
      %v2284 = vrot.slane %v2193, 1
      %v2285 = vsel %vm479, %v2282, %v2284
      %v2286 = vrot.slane %v2178, 1
      %v2287 = vrot.slane %v2106, 1
      %v2288 = vsel %vm479, %v2286, %v2287
      %v2289 = vrot.slane %v2194, 1
      %v2290 = vsel %vm479, %v2287, %v2289
      %v2291 = vrot.slane %v2179, 1
      %v2292 = vrot.slane %v2109, 1
      %v2293 = vsel %vm479, %v2291, %v2292
      %v2294 = vrot.slane %v2195, 1
      %v2295 = vsel %vm479, %v2292, %v2294
      %v2296 = vrot.slane %v2180, 1
      %v2297 = vrot.slane %v2112, 1
      %v2298 = vsel %vm479, %v2296, %v2297
      %v2299 = vrot.slane %v2196, 1
      %v2300 = vsel %vm479, %v2297, %v2299
      %v2301 = vrot.slane %v2181, 1
      %v2302 = vrot.slane %v2115, 1
      %v2303 = vsel %vm479, %v2301, %v2302
      %v2304 = vrot.slane %v2197, 1
      %v2305 = vsel %vm479, %v2302, %v2304
      %v2306 = vrot.slane %v2182, 1
      %v2307 = vrot.slane %v2118, 1
      %v2308 = vsel %vm479, %v2306, %v2307
      %v2309 = vrot.slane %v2198, 1
      %v2310 = vsel %vm479, %v2307, %v2309
      %v2343 = vmax.f32 %v2167, %v2233
      %v2344 = vmax.f32 %v2073, %v2235
      %v2345 = vmax.f32 %v2168, %v2238
      %v2346 = vmax.f32 %v2076, %v2240
      %v2347 = vmax.f32 %v2169, %v2243
      %v2348 = vmax.f32 %v2079, %v2245
      %v2349 = vmax.f32 %v2170, %v2248
      %v2350 = vmax.f32 %v2082, %v2250
      %v2351 = vmax.f32 %v2171, %v2253
      %v2352 = vmax.f32 %v2085, %v2255
      %v2353 = vmax.f32 %v2172, %v2258
      %v2354 = vmax.f32 %v2088, %v2260
      %v2355 = vmax.f32 %v2173, %v2263
      %v2356 = vmax.f32 %v2091, %v2265
      %v2357 = vmax.f32 %v2174, %v2268
      %v2358 = vmax.f32 %v2094, %v2270
      %v2359 = vmax.f32 %v2175, %v2273
      %v2360 = vmax.f32 %v2097, %v2275
      %v2361 = vmax.f32 %v2176, %v2278
      %v2362 = vmax.f32 %v2100, %v2280
      %v2363 = vmax.f32 %v2177, %v2283
      %v2364 = vmax.f32 %v2103, %v2285
      %v2365 = vmax.f32 %v2178, %v2288
      %v2366 = vmax.f32 %v2106, %v2290
      %v2367 = vmax.f32 %v2179, %v2293
      %v2368 = vmax.f32 %v2109, %v2295
      %v2369 = vmax.f32 %v2180, %v2298
      %v2370 = vmax.f32 %v2112, %v2300
      %v2371 = vmax.f32 %v2181, %v2303
      %v2372 = vmax.f32 %v2115, %v2305
      %v2373 = vmax.f32 %v2182, %v2308
      %v2374 = vmax.f32 %v2118, %v2310
      %v2375 = vrot.slane %v2167, 2
      %v2376 = vrot.slane %v2073, 2
      %v2377 = vsel %vm624, %v2375, %v2376
      %v2378 = vrot.slane %v2183, 2
      %v2379 = vsel %vm624, %v2376, %v2378
      %v2380 = vrot.slane %v2168, 2
      %v2381 = vrot.slane %v2076, 2
      %v2382 = vsel %vm624, %v2380, %v2381
      %v2383 = vrot.slane %v2184, 2
      %v2384 = vsel %vm624, %v2381, %v2383
      %v2385 = vrot.slane %v2169, 2
      %v2386 = vrot.slane %v2079, 2
      %v2387 = vsel %vm624, %v2385, %v2386
      %v2388 = vrot.slane %v2185, 2
      %v2389 = vsel %vm624, %v2386, %v2388
      %v2390 = vrot.slane %v2170, 2
      %v2391 = vrot.slane %v2082, 2
      %v2392 = vsel %vm624, %v2390, %v2391
      %v2393 = vrot.slane %v2186, 2
      %v2394 = vsel %vm624, %v2391, %v2393
      %v2395 = vrot.slane %v2171, 2
      %v2396 = vrot.slane %v2085, 2
      %v2397 = vsel %vm624, %v2395, %v2396
      %v2398 = vrot.slane %v2187, 2
      %v2399 = vsel %vm624, %v2396, %v2398
      %v2400 = vrot.slane %v2172, 2
      %v2401 = vrot.slane %v2088, 2
      %v2402 = vsel %vm624, %v2400, %v2401
      %v2403 = vrot.slane %v2188, 2
      %v2404 = vsel %vm624, %v2401, %v2403
      %v2405 = vrot.slane %v2173, 2
      %v2406 = vrot.slane %v2091, 2
      %v2407 = vsel %vm624, %v2405, %v2406
      %v2408 = vrot.slane %v2189, 2
      %v2409 = vsel %vm624, %v2406, %v2408
      %v2410 = vrot.slane %v2174, 2
      %v2411 = vrot.slane %v2094, 2
      %v2412 = vsel %vm624, %v2410, %v2411
      %v2413 = vrot.slane %v2190, 2
      %v2414 = vsel %vm624, %v2411, %v2413
      %v2415 = vrot.slane %v2175, 2
      %v2416 = vrot.slane %v2097, 2
      %v2417 = vsel %vm624, %v2415, %v2416
      %v2418 = vrot.slane %v2191, 2
      %v2419 = vsel %vm624, %v2416, %v2418
      %v2420 = vrot.slane %v2176, 2
      %v2421 = vrot.slane %v2100, 2
      %v2422 = vsel %vm624, %v2420, %v2421
      %v2423 = vrot.slane %v2192, 2
      %v2424 = vsel %vm624, %v2421, %v2423
      %v2425 = vrot.slane %v2177, 2
      %v2426 = vrot.slane %v2103, 2
      %v2427 = vsel %vm624, %v2425, %v2426
      %v2428 = vrot.slane %v2193, 2
      %v2429 = vsel %vm624, %v2426, %v2428
      %v2430 = vrot.slane %v2178, 2
      %v2431 = vrot.slane %v2106, 2
      %v2432 = vsel %vm624, %v2430, %v2431
      %v2433 = vrot.slane %v2194, 2
      %v2434 = vsel %vm624, %v2431, %v2433
      %v2435 = vrot.slane %v2179, 2
      %v2436 = vrot.slane %v2109, 2
      %v2437 = vsel %vm624, %v2435, %v2436
      %v2438 = vrot.slane %v2195, 2
      %v2439 = vsel %vm624, %v2436, %v2438
      %v2440 = vrot.slane %v2180, 2
      %v2441 = vrot.slane %v2112, 2
      %v2442 = vsel %vm624, %v2440, %v2441
      %v2443 = vrot.slane %v2196, 2
      %v2444 = vsel %vm624, %v2441, %v2443
      %v2445 = vrot.slane %v2181, 2
      %v2446 = vrot.slane %v2115, 2
      %v2447 = vsel %vm624, %v2445, %v2446
      %v2448 = vrot.slane %v2197, 2
      %v2449 = vsel %vm624, %v2446, %v2448
      %v2450 = vrot.slane %v2182, 2
      %v2451 = vrot.slane %v2118, 2
      %v2452 = vsel %vm624, %v2450, %v2451
      %v2453 = vrot.slane %v2198, 2
      %v2454 = vsel %vm624, %v2451, %v2453
      %v2487 = vmax.f32 %v2343, %v2377
      %v2488 = vmax.f32 %v2344, %v2379
      %v2489 = vmax.f32 %v2345, %v2382
      %v2490 = vmax.f32 %v2346, %v2384
      %v2491 = vmax.f32 %v2347, %v2387
      %v2492 = vmax.f32 %v2348, %v2389
      %v2493 = vmax.f32 %v2349, %v2392
      %v2494 = vmax.f32 %v2350, %v2394
      %v2495 = vmax.f32 %v2351, %v2397
      %v2496 = vmax.f32 %v2352, %v2399
      %v2497 = vmax.f32 %v2353, %v2402
      %v2498 = vmax.f32 %v2354, %v2404
      %v2499 = vmax.f32 %v2355, %v2407
      %v2500 = vmax.f32 %v2356, %v2409
      %v2501 = vmax.f32 %v2357, %v2412
      %v2502 = vmax.f32 %v2358, %v2414
      %v2503 = vmax.f32 %v2359, %v2417
      %v2504 = vmax.f32 %v2360, %v2419
      %v2505 = vmax.f32 %v2361, %v2422
      %v2506 = vmax.f32 %v2362, %v2424
      %v2507 = vmax.f32 %v2363, %v2427
      %v2508 = vmax.f32 %v2364, %v2429
      %v2509 = vmax.f32 %v2365, %v2432
      %v2510 = vmax.f32 %v2366, %v2434
      %v2511 = vmax.f32 %v2367, %v2437
      %v2512 = vmax.f32 %v2368, %v2439
      %v2513 = vmax.f32 %v2369, %v2442
      %v2514 = vmax.f32 %v2370, %v2444
      %v2515 = vmax.f32 %v2371, %v2447
      %v2516 = vmax.f32 %v2372, %v2449
      %v2517 = vmax.f32 %v2373, %v2452
      %v2518 = vmax.f32 %v2374, %v2454
      %v2519 = vrot.slane %v2167, 3
      %v2520 = vrot.slane %v2073, 3
      %v2521 = vsel %vm769, %v2519, %v2520
      %v2522 = vrot.slane %v2183, 3
      %v2523 = vsel %vm769, %v2520, %v2522
      %v2524 = vrot.slane %v2168, 3
      %v2525 = vrot.slane %v2076, 3
      %v2526 = vsel %vm769, %v2524, %v2525
      %v2527 = vrot.slane %v2184, 3
      %v2528 = vsel %vm769, %v2525, %v2527
      %v2529 = vrot.slane %v2169, 3
      %v2530 = vrot.slane %v2079, 3
      %v2531 = vsel %vm769, %v2529, %v2530
      %v2532 = vrot.slane %v2185, 3
      %v2533 = vsel %vm769, %v2530, %v2532
      %v2534 = vrot.slane %v2170, 3
      %v2535 = vrot.slane %v2082, 3
      %v2536 = vsel %vm769, %v2534, %v2535
      %v2537 = vrot.slane %v2186, 3
      %v2538 = vsel %vm769, %v2535, %v2537
      %v2539 = vrot.slane %v2171, 3
      %v2540 = vrot.slane %v2085, 3
      %v2541 = vsel %vm769, %v2539, %v2540
      %v2542 = vrot.slane %v2187, 3
      %v2543 = vsel %vm769, %v2540, %v2542
      %v2544 = vrot.slane %v2172, 3
      %v2545 = vrot.slane %v2088, 3
      %v2546 = vsel %vm769, %v2544, %v2545
      %v2547 = vrot.slane %v2188, 3
      %v2548 = vsel %vm769, %v2545, %v2547
      %v2549 = vrot.slane %v2173, 3
      %v2550 = vrot.slane %v2091, 3
      %v2551 = vsel %vm769, %v2549, %v2550
      %v2552 = vrot.slane %v2189, 3
      %v2553 = vsel %vm769, %v2550, %v2552
      %v2554 = vrot.slane %v2174, 3
      %v2555 = vrot.slane %v2094, 3
      %v2556 = vsel %vm769, %v2554, %v2555
      %v2557 = vrot.slane %v2190, 3
      %v2558 = vsel %vm769, %v2555, %v2557
      %v2559 = vrot.slane %v2175, 3
      %v2560 = vrot.slane %v2097, 3
      %v2561 = vsel %vm769, %v2559, %v2560
      %v2562 = vrot.slane %v2191, 3
      %v2563 = vsel %vm769, %v2560, %v2562
      %v2564 = vrot.slane %v2176, 3
      %v2565 = vrot.slane %v2100, 3
      %v2566 = vsel %vm769, %v2564, %v2565
      %v2567 = vrot.slane %v2192, 3
      %v2568 = vsel %vm769, %v2565, %v2567
      %v2569 = vrot.slane %v2177, 3
      %v2570 = vrot.slane %v2103, 3
      %v2571 = vsel %vm769, %v2569, %v2570
      %v2572 = vrot.slane %v2193, 3
      %v2573 = vsel %vm769, %v2570, %v2572
      %v2574 = vrot.slane %v2178, 3
      %v2575 = vrot.slane %v2106, 3
      %v2576 = vsel %vm769, %v2574, %v2575
      %v2577 = vrot.slane %v2194, 3
      %v2578 = vsel %vm769, %v2575, %v2577
      %v2579 = vrot.slane %v2179, 3
      %v2580 = vrot.slane %v2109, 3
      %v2581 = vsel %vm769, %v2579, %v2580
      %v2582 = vrot.slane %v2195, 3
      %v2583 = vsel %vm769, %v2580, %v2582
      %v2584 = vrot.slane %v2180, 3
      %v2585 = vrot.slane %v2112, 3
      %v2586 = vsel %vm769, %v2584, %v2585
      %v2587 = vrot.slane %v2196, 3
      %v2588 = vsel %vm769, %v2585, %v2587
      %v2589 = vrot.slane %v2181, 3
      %v2590 = vrot.slane %v2115, 3
      %v2591 = vsel %vm769, %v2589, %v2590
      %v2592 = vrot.slane %v2197, 3
      %v2593 = vsel %vm769, %v2590, %v2592
      %v2594 = vrot.slane %v2182, 3
      %v2595 = vrot.slane %v2118, 3
      %v2596 = vsel %vm769, %v2594, %v2595
      %v2597 = vrot.slane %v2198, 3
      %v2598 = vsel %vm769, %v2595, %v2597
      %v2631 = vmax.f32 %v2487, %v2521
      %v2632 = vmax.f32 %v2488, %v2523
      %v2633 = vmax.f32 %v2489, %v2526
      %v2634 = vmax.f32 %v2490, %v2528
      %v2635 = vmax.f32 %v2491, %v2531
      %v2636 = vmax.f32 %v2492, %v2533
      %v2637 = vmax.f32 %v2493, %v2536
      %v2638 = vmax.f32 %v2494, %v2538
      %v2639 = vmax.f32 %v2495, %v2541
      %v2640 = vmax.f32 %v2496, %v2543
      %v2641 = vmax.f32 %v2497, %v2546
      %v2642 = vmax.f32 %v2498, %v2548
      %v2643 = vmax.f32 %v2499, %v2551
      %v2644 = vmax.f32 %v2500, %v2553
      %v2645 = vmax.f32 %v2501, %v2556
      %v2646 = vmax.f32 %v2502, %v2558
      %v2647 = vmax.f32 %v2503, %v2561
      %v2648 = vmax.f32 %v2504, %v2563
      %v2649 = vmax.f32 %v2505, %v2566
      %v2650 = vmax.f32 %v2506, %v2568
      %v2651 = vmax.f32 %v2507, %v2571
      %v2652 = vmax.f32 %v2508, %v2573
      %v2653 = vmax.f32 %v2509, %v2576
      %v2654 = vmax.f32 %v2510, %v2578
      %v2655 = vmax.f32 %v2511, %v2581
      %v2656 = vmax.f32 %v2512, %v2583
      %v2657 = vmax.f32 %v2513, %v2586
      %v2658 = vmax.f32 %v2514, %v2588
      %v2659 = vmax.f32 %v2515, %v2591
      %v2660 = vmax.f32 %v2516, %v2593
      %v2661 = vmax.f32 %v2517, %v2596
      %v2662 = vmax.f32 %v2518, %v2598
      %v2663 = vrot.slane %v2167, 4
      %v2664 = vrot.slane %v2073, 4
      %v2665 = vsel %vm914, %v2663, %v2664
      %v2666 = vrot.slane %v2183, 4
      %v2667 = vsel %vm914, %v2664, %v2666
      %v2668 = vrot.slane %v2168, 4
      %v2669 = vrot.slane %v2076, 4
      %v2670 = vsel %vm914, %v2668, %v2669
      %v2671 = vrot.slane %v2184, 4
      %v2672 = vsel %vm914, %v2669, %v2671
      %v2673 = vrot.slane %v2169, 4
      %v2674 = vrot.slane %v2079, 4
      %v2675 = vsel %vm914, %v2673, %v2674
      %v2676 = vrot.slane %v2185, 4
      %v2677 = vsel %vm914, %v2674, %v2676
      %v2678 = vrot.slane %v2170, 4
      %v2679 = vrot.slane %v2082, 4
      %v2680 = vsel %vm914, %v2678, %v2679
      %v2681 = vrot.slane %v2186, 4
      %v2682 = vsel %vm914, %v2679, %v2681
      %v2683 = vrot.slane %v2171, 4
      %v2684 = vrot.slane %v2085, 4
      %v2685 = vsel %vm914, %v2683, %v2684
      %v2686 = vrot.slane %v2187, 4
      %v2687 = vsel %vm914, %v2684, %v2686
      %v2688 = vrot.slane %v2172, 4
      %v2689 = vrot.slane %v2088, 4
      %v2690 = vsel %vm914, %v2688, %v2689
      %v2691 = vrot.slane %v2188, 4
      %v2692 = vsel %vm914, %v2689, %v2691
      %v2693 = vrot.slane %v2173, 4
      %v2694 = vrot.slane %v2091, 4
      %v2695 = vsel %vm914, %v2693, %v2694
      %v2696 = vrot.slane %v2189, 4
      %v2697 = vsel %vm914, %v2694, %v2696
      %v2698 = vrot.slane %v2174, 4
      %v2699 = vrot.slane %v2094, 4
      %v2700 = vsel %vm914, %v2698, %v2699
      %v2701 = vrot.slane %v2190, 4
      %v2702 = vsel %vm914, %v2699, %v2701
      %v2703 = vrot.slane %v2175, 4
      %v2704 = vrot.slane %v2097, 4
      %v2705 = vsel %vm914, %v2703, %v2704
      %v2706 = vrot.slane %v2191, 4
      %v2707 = vsel %vm914, %v2704, %v2706
      %v2708 = vrot.slane %v2176, 4
      %v2709 = vrot.slane %v2100, 4
      %v2710 = vsel %vm914, %v2708, %v2709
      %v2711 = vrot.slane %v2192, 4
      %v2712 = vsel %vm914, %v2709, %v2711
      %v2713 = vrot.slane %v2177, 4
      %v2714 = vrot.slane %v2103, 4
      %v2715 = vsel %vm914, %v2713, %v2714
      %v2716 = vrot.slane %v2193, 4
      %v2717 = vsel %vm914, %v2714, %v2716
      %v2718 = vrot.slane %v2178, 4
      %v2719 = vrot.slane %v2106, 4
      %v2720 = vsel %vm914, %v2718, %v2719
      %v2721 = vrot.slane %v2194, 4
      %v2722 = vsel %vm914, %v2719, %v2721
      %v2723 = vrot.slane %v2179, 4
      %v2724 = vrot.slane %v2109, 4
      %v2725 = vsel %vm914, %v2723, %v2724
      %v2726 = vrot.slane %v2195, 4
      %v2727 = vsel %vm914, %v2724, %v2726
      %v2728 = vrot.slane %v2180, 4
      %v2729 = vrot.slane %v2112, 4
      %v2730 = vsel %vm914, %v2728, %v2729
      %v2731 = vrot.slane %v2196, 4
      %v2732 = vsel %vm914, %v2729, %v2731
      %v2733 = vrot.slane %v2181, 4
      %v2734 = vrot.slane %v2115, 4
      %v2735 = vsel %vm914, %v2733, %v2734
      %v2736 = vrot.slane %v2197, 4
      %v2737 = vsel %vm914, %v2734, %v2736
      %v2738 = vrot.slane %v2182, 4
      %v2739 = vrot.slane %v2118, 4
      %v2740 = vsel %vm914, %v2738, %v2739
      %v2741 = vrot.slane %v2198, 4
      %v2742 = vsel %vm914, %v2739, %v2741
      %v2775 = vmax.f32 %v2631, %v2665
      %v2776 = vmax.f32 %v2632, %v2667
      %v2777 = vmax.f32 %v2633, %v2670
      %v2778 = vmax.f32 %v2634, %v2672
      %v2779 = vmax.f32 %v2635, %v2675
      %v2780 = vmax.f32 %v2636, %v2677
      %v2781 = vmax.f32 %v2637, %v2680
      %v2782 = vmax.f32 %v2638, %v2682
      %v2783 = vmax.f32 %v2639, %v2685
      %v2784 = vmax.f32 %v2640, %v2687
      %v2785 = vmax.f32 %v2641, %v2690
      %v2786 = vmax.f32 %v2642, %v2692
      %v2787 = vmax.f32 %v2643, %v2695
      %v2788 = vmax.f32 %v2644, %v2697
      %v2789 = vmax.f32 %v2645, %v2700
      %v2790 = vmax.f32 %v2646, %v2702
      %v2791 = vmax.f32 %v2647, %v2705
      %v2792 = vmax.f32 %v2648, %v2707
      %v2793 = vmax.f32 %v2649, %v2710
      %v2794 = vmax.f32 %v2650, %v2712
      %v2795 = vmax.f32 %v2651, %v2715
      %v2796 = vmax.f32 %v2652, %v2717
      %v2797 = vmax.f32 %v2653, %v2720
      %v2798 = vmax.f32 %v2654, %v2722
      %v2799 = vmax.f32 %v2655, %v2725
      %v2800 = vmax.f32 %v2656, %v2727
      %v2801 = vmax.f32 %v2657, %v2730
      %v2802 = vmax.f32 %v2658, %v2732
      %v2803 = vmax.f32 %v2659, %v2735
      %v2804 = vmax.f32 %v2660, %v2737
      %v2805 = vmax.f32 %v2661, %v2740
      %v2806 = vmax.f32 %v2662, %v2742
      %vm2807 = vcmask 31744
      %2808 = vst.msk [vmem:[%s147] sm:$0xff] %vm2807, %v148
      %2809 = vst.msk [vmem:[%s147 + $0x8] sm:$0xff] %vm2807, %v149
      %2810 = vst.msk [vmem:[%s147 + $0x10] sm:$0xff] %vm2807, %v150
      %2811 = vst.msk [vmem:[%s147 + $0x18] sm:$0xff] %vm2807, %v151
      %2812 = vst.msk [vmem:[%s147 + $0x20] sm:$0xff] %vm2807, %v152
      %2813 = vst.msk [vmem:[%s147 + $0x28] sm:$0xff] %vm2807, %v153
      %2814 = vst.msk [vmem:[%s147 + $0x30] sm:$0xff] %vm2807, %v154
      %2815 = vst.msk [vmem:[%s147 + $0x38] sm:$0xff] %vm2807, %v155
      %2816 = vst.msk [vmem:[%s147 + $0x40] sm:$0xff] %vm2807, %v156
      %2817 = vst.msk [vmem:[%s147 + $0x48] sm:$0xff] %vm2807, %v157
      %2818 = vst.msk [vmem:[%s147 + $0x50] sm:$0xff] %vm2807, %v158
      %2819 = vst.msk [vmem:[%s147 + $0x58] sm:$0xff] %vm2807, %v159
      %2820 = vst.msk [vmem:[%s147 + $0x60] sm:$0xff] %vm2807, %v160
      %2821 = vst.msk [vmem:[%s147 + $0x68] sm:$0xff] %vm2807, %v161
      %2822 = vst.msk [vmem:[%s147 + $0x70] sm:$0xff] %vm2807, %v162
      %2823 = vst.msk [vmem:[%s147 + $0x78] sm:$0xff] %vm2807, %v163
      %2824 = vst.msk [vmem:[%s147 + $0x80] sm:$0xff] %vm2807, %v164
      %2825 = vst.msk [vmem:[%s147 + $0x88] sm:$0xff] %vm2807, %v165
      %2826 = vst.msk [vmem:[%s147 + $0x90] sm:$0xff] %vm2807, %v166
      %2827 = vst.msk [vmem:[%s147 + $0x98] sm:$0xff] %vm2807, %v167
      %2828 = vst.msk [vmem:[%s147 + $0xa0] sm:$0xff] %vm2807, %v168
      %2829 = vst.msk [vmem:[%s147 + $0xa8] sm:$0xff] %vm2807, %v169
      %2830 = vst.msk [vmem:[%s147 + $0xb0] sm:$0xff] %vm2807, %v170
      %2831 = vst.msk [vmem:[%s147 + $0xb8] sm:$0xff] %vm2807, %v171
      %2832 = vst.msk [vmem:[%s147 + $0xc0] sm:$0xff] %vm2807, %v172
      %2833 = vst.msk [vmem:[%s147 + $0xc8] sm:$0xff] %vm2807, %v173
      %2834 = vst.msk [vmem:[%s147 + $0xd0] sm:$0xff] %vm2807, %v174
      %2835 = vst.msk [vmem:[%s147 + $0xd8] sm:$0xff] %vm2807, %v175
      %2836 = vst.msk [vmem:[%s147 + $0xe0] sm:$0xff] %vm2807, %v176
      %2837 = vst.msk [vmem:[%s147 + $0xe8] sm:$0xff] %vm2807, %v177
      %2838 = vst.msk [vmem:[%s147 + $0xf0] sm:$0xff] %vm2807, %v178
      %2839 = vst.msk [vmem:[%s147 + $0xf8] sm:$0xff] %vm2807, %v179
      %s2840 = scalar_lea.vmem %s147, 256
      %2841 = vst.msk [vmem:[%s2840] sm:$0xff] %vm2807, %v1027
      %2842 = vst.msk [vmem:[%s2840 + $0x8] sm:$0xff] %vm2807, %v1028
      %2843 = vst.msk [vmem:[%s2840 + $0x10] sm:$0xff] %vm2807, %v1029
      %2844 = vst.msk [vmem:[%s2840 + $0x18] sm:$0xff] %vm2807, %v1030
      %2845 = vst.msk [vmem:[%s2840 + $0x20] sm:$0xff] %vm2807, %v1031
      %2846 = vst.msk [vmem:[%s2840 + $0x28] sm:$0xff] %vm2807, %v1032
      %2847 = vst.msk [vmem:[%s2840 + $0x30] sm:$0xff] %vm2807, %v1033
      %2848 = vst.msk [vmem:[%s2840 + $0x38] sm:$0xff] %vm2807, %v1034
      %2849 = vst.msk [vmem:[%s2840 + $0x40] sm:$0xff] %vm2807, %v1035
      %2850 = vst.msk [vmem:[%s2840 + $0x48] sm:$0xff] %vm2807, %v1036
      %2851 = vst.msk [vmem:[%s2840 + $0x50] sm:$0xff] %vm2807, %v1037
      %2852 = vst.msk [vmem:[%s2840 + $0x58] sm:$0xff] %vm2807, %v1038
      %2853 = vst.msk [vmem:[%s2840 + $0x60] sm:$0xff] %vm2807, %v1039
      %2854 = vst.msk [vmem:[%s2840 + $0x68] sm:$0xff] %vm2807, %v1040
      %2855 = vst.msk [vmem:[%s2840 + $0x70] sm:$0xff] %vm2807, %v1041
      %2856 = vst.msk [vmem:[%s2840 + $0x78] sm:$0xff] %vm2807, %v1042
      %2857 = vst.msk [vmem:[%s2840 + $0x80] sm:$0xff] %vm2807, %v1043
      %2858 = vst.msk [vmem:[%s2840 + $0x88] sm:$0xff] %vm2807, %v1044
      %2859 = vst.msk [vmem:[%s2840 + $0x90] sm:$0xff] %vm2807, %v1045
      %2860 = vst.msk [vmem:[%s2840 + $0x98] sm:$0xff] %vm2807, %v1046
      %2861 = vst.msk [vmem:[%s2840 + $0xa0] sm:$0xff] %vm2807, %v1047
      %2862 = vst.msk [vmem:[%s2840 + $0xa8] sm:$0xff] %vm2807, %v1048
      %2863 = vst.msk [vmem:[%s2840 + $0xb0] sm:$0xff] %vm2807, %v1049
      %2864 = vst.msk [vmem:[%s2840 + $0xb8] sm:$0xff] %vm2807, %v1050
      %2865 = vst.msk [vmem:[%s2840 + $0xc0] sm:$0xff] %vm2807, %v1051
      %2866 = vst.msk [vmem:[%s2840 + $0xc8] sm:$0xff] %vm2807, %v1052
      %2867 = vst.msk [vmem:[%s2840 + $0xd0] sm:$0xff] %vm2807, %v1053
      %2868 = vst.msk [vmem:[%s2840 + $0xd8] sm:$0xff] %vm2807, %v1054
      %2869 = vst.msk [vmem:[%s2840 + $0xe0] sm:$0xff] %vm2807, %v1055
      %2870 = vst.msk [vmem:[%s2840 + $0xe8] sm:$0xff] %vm2807, %v1056
      %2871 = vst.msk [vmem:[%s2840 + $0xf0] sm:$0xff] %vm2807, %v1057
      %2872 = vst.msk [vmem:[%s2840 + $0xf8] sm:$0xff] %vm2807, %v1058
      %s2873 = scalar_lea.vmem %s147, 512
      %2874 = vst.msk [vmem:[%s2873] sm:$0xff] %vm2807, %v1901
      %2875 = vst.msk [vmem:[%s2873 + $0x8] sm:$0xff] %vm2807, %v1902
      %2876 = vst.msk [vmem:[%s2873 + $0x10] sm:$0xff] %vm2807, %v1903
      %2877 = vst.msk [vmem:[%s2873 + $0x18] sm:$0xff] %vm2807, %v1904
      %2878 = vst.msk [vmem:[%s2873 + $0x20] sm:$0xff] %vm2807, %v1905
      %2879 = vst.msk [vmem:[%s2873 + $0x28] sm:$0xff] %vm2807, %v1906
      %2880 = vst.msk [vmem:[%s2873 + $0x30] sm:$0xff] %vm2807, %v1907
      %2881 = vst.msk [vmem:[%s2873 + $0x38] sm:$0xff] %vm2807, %v1908
      %2882 = vst.msk [vmem:[%s2873 + $0x40] sm:$0xff] %vm2807, %v1909
      %2883 = vst.msk [vmem:[%s2873 + $0x48] sm:$0xff] %vm2807, %v1910
      %2884 = vst.msk [vmem:[%s2873 + $0x50] sm:$0xff] %vm2807, %v1911
      %2885 = vst.msk [vmem:[%s2873 + $0x58] sm:$0xff] %vm2807, %v1912
      %2886 = vst.msk [vmem:[%s2873 + $0x60] sm:$0xff] %vm2807, %v1913
      %2887 = vst.msk [vmem:[%s2873 + $0x68] sm:$0xff] %vm2807, %v1914
      %2888 = vst.msk [vmem:[%s2873 + $0x70] sm:$0xff] %vm2807, %v1915
      %2889 = vst.msk [vmem:[%s2873 + $0x78] sm:$0xff] %vm2807, %v1916
      %2890 = vst.msk [vmem:[%s2873 + $0x80] sm:$0xff] %vm2807, %v1917
      %2891 = vst.msk [vmem:[%s2873 + $0x88] sm:$0xff] %vm2807, %v1918
      %2892 = vst.msk [vmem:[%s2873 + $0x90] sm:$0xff] %vm2807, %v1919
      %2893 = vst.msk [vmem:[%s2873 + $0x98] sm:$0xff] %vm2807, %v1920
      %2894 = vst.msk [vmem:[%s2873 + $0xa0] sm:$0xff] %vm2807, %v1921
      %2895 = vst.msk [vmem:[%s2873 + $0xa8] sm:$0xff] %vm2807, %v1922
      %2896 = vst.msk [vmem:[%s2873 + $0xb0] sm:$0xff] %vm2807, %v1923
      %2897 = vst.msk [vmem:[%s2873 + $0xb8] sm:$0xff] %vm2807, %v1924
      %2898 = vst.msk [vmem:[%s2873 + $0xc0] sm:$0xff] %vm2807, %v1925
      %2899 = vst.msk [vmem:[%s2873 + $0xc8] sm:$0xff] %vm2807, %v1926
      %2900 = vst.msk [vmem:[%s2873 + $0xd0] sm:$0xff] %vm2807, %v1927
      %2901 = vst.msk [vmem:[%s2873 + $0xd8] sm:$0xff] %vm2807, %v1928
      %2902 = vst.msk [vmem:[%s2873 + $0xe0] sm:$0xff] %vm2807, %v1929
      %2903 = vst.msk [vmem:[%s2873 + $0xe8] sm:$0xff] %vm2807, %v1930
      %2904 = vst.msk [vmem:[%s2873 + $0xf0] sm:$0xff] %vm2807, %v1931
      %2905 = vst.msk [vmem:[%s2873 + $0xf8] sm:$0xff] %vm2807, %v1932
      %s2906 = scalar_lea.vmem %s147, 768
      %2907 = vst.msk [vmem:[%s2906] sm:$0xff] %vm2807, %v2775
      %2908 = vst.msk [vmem:[%s2906 + $0x8] sm:$0xff] %vm2807, %v2776
      %2909 = vst.msk [vmem:[%s2906 + $0x10] sm:$0xff] %vm2807, %v2777
      %2910 = vst.msk [vmem:[%s2906 + $0x18] sm:$0xff] %vm2807, %v2778
      %2911 = vst.msk [vmem:[%s2906 + $0x20] sm:$0xff] %vm2807, %v2779
      %2912 = vst.msk [vmem:[%s2906 + $0x28] sm:$0xff] %vm2807, %v2780
      %2913 = vst.msk [vmem:[%s2906 + $0x30] sm:$0xff] %vm2807, %v2781
      %2914 = vst.msk [vmem:[%s2906 + $0x38] sm:$0xff] %vm2807, %v2782
      %2915 = vst.msk [vmem:[%s2906 + $0x40] sm:$0xff] %vm2807, %v2783
      %2916 = vst.msk [vmem:[%s2906 + $0x48] sm:$0xff] %vm2807, %v2784
      %2917 = vst.msk [vmem:[%s2906 + $0x50] sm:$0xff] %vm2807, %v2785
      %2918 = vst.msk [vmem:[%s2906 + $0x58] sm:$0xff] %vm2807, %v2786
      %2919 = vst.msk [vmem:[%s2906 + $0x60] sm:$0xff] %vm2807, %v2787
      %2920 = vst.msk [vmem:[%s2906 + $0x68] sm:$0xff] %vm2807, %v2788
      %2921 = vst.msk [vmem:[%s2906 + $0x70] sm:$0xff] %vm2807, %v2789
      %2922 = vst.msk [vmem:[%s2906 + $0x78] sm:$0xff] %vm2807, %v2790
      %2923 = vst.msk [vmem:[%s2906 + $0x80] sm:$0xff] %vm2807, %v2791
      %2924 = vst.msk [vmem:[%s2906 + $0x88] sm:$0xff] %vm2807, %v2792
      %2925 = vst.msk [vmem:[%s2906 + $0x90] sm:$0xff] %vm2807, %v2793
      %2926 = vst.msk [vmem:[%s2906 + $0x98] sm:$0xff] %vm2807, %v2794
      %2927 = vst.msk [vmem:[%s2906 + $0xa0] sm:$0xff] %vm2807, %v2795
      %2928 = vst.msk [vmem:[%s2906 + $0xa8] sm:$0xff] %vm2807, %v2796
      %2929 = vst.msk [vmem:[%s2906 + $0xb0] sm:$0xff] %vm2807, %v2797
      %2930 = vst.msk [vmem:[%s2906 + $0xb8] sm:$0xff] %vm2807, %v2798
      %2931 = vst.msk [vmem:[%s2906 + $0xc0] sm:$0xff] %vm2807, %v2799
      %2932 = vst.msk [vmem:[%s2906 + $0xc8] sm:$0xff] %vm2807, %v2800
      %2933 = vst.msk [vmem:[%s2906 + $0xd0] sm:$0xff] %vm2807, %v2801
      %2934 = vst.msk [vmem:[%s2906 + $0xd8] sm:$0xff] %vm2807, %v2802
      %2935 = vst.msk [vmem:[%s2906 + $0xe0] sm:$0xff] %vm2807, %v2803
      %2936 = vst.msk [vmem:[%s2906 + $0xe8] sm:$0xff] %vm2807, %v2804
      %2937 = vst.msk [vmem:[%s2906 + $0xf0] sm:$0xff] %vm2807, %v2805
      %2938 = vst.msk [vmem:[%s2906 + $0xf8] sm:$0xff] %vm2807, %v2806
      %p2939 = scmp.lt.s32.totalorder %s16, 1
      %s2940 = scalar_select %p2939, %s16, 1
      %p2941 = scmp.lt.s32.totalorder %s17, 0
      %s2942 = scalar_select %p2941, %s17, 0
      %s2943 = smul.addr %s2940, 128
      %s2944 = sadd.s32 %s2942, %s2943
      %s2945 = smul.addr %s2944, 8
      %s2946 = scalar_lea.vmem %s1, %s2945
      // Predicated region
      $region25: #{tpu_custom_call.1} parent=23 // pred_check
        %p2947 = pneg %p72
      $region26: #{tpu_custom_call.1} parent=23 // pred_check_branch
        %2949 = sbr.rel (%p2947) target = $region28
      $region27: #{tpu_custom_call.1} parent=23 // pred_region
        _
      $region28: #{tpu_custom_call.1} parent=23 // pred_fallthru
        _
    $region24: #{tpu_custom_call.1} parent=5 // pred_fallthru
      _
    %p2950 = scmp.le.s32.totalorder 2, %s7
    // Predicated region
    $region29: #{tpu_custom_call.1} parent=5 // pred_check
      %p2951 = pneg %p2950
    $region30: #{tpu_custom_call.1} parent=5 // pred_check_branch
      %2953 = sbr.rel (%p2951) target = $region32
    $region31: #{tpu_custom_call.1} parent=5 // pred_region
      %s2954 = ssub.s32 %s7, 2
      // Predicated region
      $region33: #{tpu_custom_call.1} parent=31 // pred_check
        %p2955 = pneg %p78
      $region34: #{tpu_custom_call.1} parent=31 // pred_check_branch
        %2957 = sbr.rel (%p2955) target = $region36
      $region35: #{tpu_custom_call.1} parent=31 // pred_region
        %p2958 = scmp.lt.s32.totalorder %s18, 1
        %s2959 = scalar_select %p2958, %s18, 1
        %p2960 = scmp.lt.s32.totalorder %s19, 0
        %s2961 = scalar_select %p2960, %s19, 0
        %s2962 = smul.addr %s2959, 128
        %s2963 = sadd.s32 %s2961, %s2962
        %s2964 = smul.addr %s2963, 8
        %s2965 = scalar_lea.vmem %s1, %s2964
      $region36: #{tpu_custom_call.1} parent=31 // pred_fallthru
        _
    $region32: #{tpu_custom_call.1} parent=5 // pred_fallthru
      _
  $region6: #{tpu_custom_call.1} parent=0 // loop_footer
    %s11 = sadd.s32 1, %s7
  $region7: #{tpu_custom_call.1} parent=0 // loop_footer_branch
    %6 = sbr.rel target = $region3
  $region8: #{tpu_custom_call.1} parent=0 // loop_exit
    _

</llo_original>
